<compile_context>
chip_gen: v7x
topology: tpu7x:2x2x1
jax: 0.10.0
libtpu: 0.0.40
codegen_flags: <defaults>
</compile_context>

<pallas_src>
import jax
import jax.numpy as jnp
from jax.experimental import pallas as pl
from jax.experimental.pallas import tpu as pltpu


def alexnet_head_kernel(x_ref, w1_ref, b1_ref, w2_ref, b2_ref, w3_ref, b3_ref,
                        o_ref, h1_acc):
    """Fused 3-layer MLP with a K-tiled first layer.

    Grid = (row_tiles, k_tiles).  Layer-1 partial products accumulate in the
    f32 VMEM scratch `h1_acc`; layers 2/3 and the store run on the last k step.
    nn.Dropout is identity at inference.
    """
    # TODO(synk): training-mode dropout (stateful PRNG masking) is not implemented.
    k = pl.program_id(1)
    nk = pl.num_programs(1)

    @pl.when(k == 0)
    def _():
        h1_acc[...] = jnp.zeros_like(h1_acc)

    # Layer 1 partial: (tm, tk) @ (tk, H1), bf16 operands, f32 MXU accumulation.
    h1_acc[...] += jnp.dot(x_ref[...], w1_ref[...],
                           preferred_element_type=jnp.float32)

    @pl.when(k == nk - 1)
    def _():
        compute_dtype = w2_ref.dtype
        # Layer 1 epilogue: bias + ReLU, cast back to the streaming dtype.
        h1 = jnp.maximum(h1_acc[...] + b1_ref[...], 0.0).astype(compute_dtype)
        # Layer 2: Linear + bias + ReLU.
        h2 = jnp.dot(h1, w2_ref[...], preferred_element_type=jnp.float32)
        h2 = jnp.maximum(h2 + b2_ref[...], 0.0).astype(compute_dtype)
        # Layer 3: Linear + bias (logits), lane-dense (padded) store.
        h3 = jnp.dot(h2, w3_ref[...], preferred_element_type=jnp.float32)
        o_ref[...] = (h3 + b3_ref[...]).astype(o_ref.dtype)


def _pick_row_tile(n, cap=256):
    """Largest MXU-friendly row tile <= cap dividing N; then split once more so
    there are >= 2 'parallel' row tiles (v7x second TensorCore) when possible."""
    tm = n
    for t in (256, 128, 64, 32, 16, 8):
        if t <= cap and n % t == 0:
            tm = t
            break
    if tm == n and tm % 16 == 0:   # single row tile -> split for megacore
        tm //= 2
    return tm


def _pick_k_tile(d_in):
    """Stream W1 along D_in in chunks so it never has to be fully resident."""
    for t in (2048, 1024, 512):
        if d_in % t == 0:
            return t
    return d_in


def _round_up(x, m):
    return (x + m - 1) // m * m


def alexnet_head(x, w1, b1, w2, b2, w3, b3, *,
                 tm=None, tk=None, compute_dtype=jnp.bfloat16):
    """AlexNet classifier-head forward.

    x:  (N, D_in) activations.
    wK: (in, out) weights, i.e. the transpose of PyTorch's Linear.weight.
    bK: (out,)    biases.
    Returns a 1-D array of length N * D_out (== torch.flatten(head(x))).
    """
    N, D_in = x.shape
    H1 = w1.shape[1]
    H2 = w2.shape[1]
    D_out = w3.shape[1]
    out_dtype = x.dtype

    if tm is None:
        tm = _pick_row_tile(N)
    if tk is None:
        tk = _pick_k_tile(D_in)
    assert N % tm == 0 and D_in % tk == 0, (N, tm, D_in, tk)

    # Lane-dense output: pad W3/b3 columns to a multiple of 128, slice afterwards.
    Dp = max(_round_up(D_out, 128), 128)
    if Dp != D_out:
        w3 = jnp.pad(w3, ((0, 0), (0, Dp - D_out)))
        b3 = jnp.pad(b3, (0, Dp - D_out))

    # Stream matmul operands in compute_dtype (bf16 halves HBM traffic; the MXU
    # runs bf16 natively).  Biases stay f32 (added to f32 accumulators).
    x = x.astype(compute_dtype)
    w1 = w1.astype(compute_dtype)
    w2 = w2.astype(compute_dtype)
    w3 = w3.astype(compute_dtype)
    b1 = b1.reshape(1, H1).astype(jnp.float32)
    b2 = b2.reshape(1, H2).astype(jnp.float32)
    b3 = b3.reshape(1, Dp).astype(jnp.float32)

    grid = (N // tm, D_in // tk)

    # VMEM footprint -> request only what we need (plus margin), not all of VMEM.
    w_isz = jnp.dtype(compute_dtype).itemsize
    o_isz = jnp.dtype(out_dtype).itemsize
    footprint = (
        2 * tm * tk * w_isz            # x tile (double-buffered)
        + 2 * tk * H1 * w_isz          # streamed W1 K-chunk (double-buffered)
        + (H1 * H2 + H2 * Dp) * w_isz  # resident W2, W3 (single-buffered)
        + 4 * (H1 + H2 + Dp)           # resident f32 biases
        + 2 * tm * Dp * o_isz          # output tile (double-buffered)
        + 4 * tm * H1                  # f32 h1 accumulator scratch
    )
    vmem_limit = int(max(2 * footprint + (4 << 20), 16 << 20))

    def run(resident_mode):
        def resident(shape):
            return pl.BlockSpec(shape, lambda i, k: (0, 0),
                                pipeline_mode=resident_mode)

        return pl.pallas_call(
            alexnet_head_kernel,
            out_shape=jax.ShapeDtypeStruct((N, Dp), out_dtype),
            grid_spec=pltpu.PrefetchScalarGridSpec(
                num_scalar_prefetch=0,
                grid=grid,
                in_specs=[
                    pl.BlockSpec((tm, tk), lambda i, k: (i, k)),   # x row/K tile
                    pl.BlockSpec((tk, H1), lambda i, k: (k, 0)),   # W1 K-chunk (streamed)
                    resident((1, H1)),                             # b1 (resident)
                    resident((H1, H2)),                            # W2 (resident)
                    resident((1, H2)),                             # b2 (resident)
                    resident((H2, Dp)),                            # W3 (resident)
                    resident((1, Dp)),                             # b3 (resident)
                ],
                out_specs=pl.BlockSpec((tm, Dp), lambda i, k: (i, 0)),
                scratch_shapes=[pltpu.VMEM((tm, H1), jnp.float32)],
            ),
            compiler_params=pltpu.CompilerParams(
                dimension_semantics=("parallel", "arbitrary"),
                vmem_limit_bytes=vmem_limit,
            ),
        )(x, w1, b1, w2, b2, w3, b3)

    try:
        # Buffered(1): constant-index operands get a single VMEM buffer
        # (halves resident-weight VMEM vs the default double-buffering).
        out = run(pl.Buffered(1))
    except Exception:  # fallback for builds that reject buffer_count=1
        out = run(None)

    if Dp != D_out:
        out = out[:, :D_out]
    # torch.flatten(x) with no dims -> 1-D (wrapper glue, not the hot path).
    return out.reshape(-1)


def _ref_forward(x, w1, b1, w2, b2, w3, b3, compute_dtype=jnp.float32):
    cd = compute_dtype
    h = jnp.dot(x.astype(cd), w1.astype(cd),
                preferred_element_type=jnp.float32) + b1
    h = jnp.maximum(h, 0.0)
    h = jnp.dot(h.astype(cd), w2.astype(cd),
                preferred_element_type=jnp.float32) + b2
    h = jnp.maximum(h, 0.0)
    h = jnp.dot(h.astype(cd), w3.astype(cd),
                preferred_element_type=jnp.float32) + b3
    return h.reshape(-1)


if __name__ == "__main__":
    # Small shapes consistent with the module (scaled-down 9216/4096/4096/1000
    # classifier head).  D_out=120 is deliberately NOT a multiple of 128 so the
    # lane-padding + post-slice path is exercised.
    N, D_in, H1, H2, D_out = 32, 512, 256, 256, 120

    key = jax.random.PRNGKey(0)
    kx, k1, k2, k3, kb1, kb2, kb3 = jax.random.split(key, 7)

    x = jax.random.normal(kx, (N, D_in), dtype=jnp.float32)

    # Synthetic params, stored (in, out) == PyTorch Linear.weight.T.
    w1 = jax.random.normal(k1, (D_in, H1), dtype=jnp.float32) * 0.02
    b1 = jax.random.normal(kb1, (H1,), dtype=jnp.float32) * 0.01
    w2 = jax.random.normal(k2, (H1, H2), dtype=jnp.float32) * 0.02
    b2 = jax.random.normal(kb2, (H2,), dtype=jnp.float32) * 0.01
    w3 = jax.random.normal(k3, (H2, D_out), dtype=jnp.float32) * 0.02
    b3 = jax.random.normal(kb3, (D_out,), dtype=jnp.float32) * 0.01

    # tk=256 -> 2 K-steps so the layer-1 accumulation path is exercised;
    # _pick_row_tile gives 2 parallel row tiles.
    out = alexnet_head(x, w1, b1, w2, b2, w3, b3,
                       tk=256, compute_dtype=jnp.bfloat16)
    out = jax.block_until_ready(out)

    ref = _ref_forward(x, w1, b1, w2, b2, w3, b3, compute_dtype=jnp.bfloat16)
    assert out.shape == (N * D_out,), out.shape
    assert jnp.allclose(out, ref, atol=1e-2, rtol=1e-2), (
        "mismatch vs JAX reference, max abs err = %f"
        % float(jnp.max(jnp.abs(out - ref))))

    print("KERNEL_OK")
</pallas_src>

<mosaic_0001>
module attributes {stable_mosaic.version = 11 : i64} {
  func.func @alexnet_head_kernel(%arg0: i32, %arg1: i32, %arg2: memref<16x256xbf16, #tpu.memory_space<vmem>>, %arg3: memref<256x256xbf16, #tpu.memory_space<vmem>>, %arg4: memref<1x256xf32, #tpu.memory_space<vmem>>, %arg5: memref<256x256xbf16, #tpu.memory_space<vmem>>, %arg6: memref<1x256xf32, #tpu.memory_space<vmem>>, %arg7: memref<256x128xbf16, #tpu.memory_space<vmem>>, %arg8: memref<1x128xf32, #tpu.memory_space<vmem>>, %arg9: memref<16x128xf32, #tpu.memory_space<vmem>>, %arg10: memref<16x256xf32, #tpu.memory_space<vmem>>) attributes {dimension_semantics = [#tpu.dimension_semantics<parallel>, #tpu.dimension_semantics<arbitrary>], iteration_bounds = array<i64: 2, 2>, scalar_prefetch = 0 : i64, scratch_operands = 1 : i64, tpu.core_type = #tpu.core_type<tc>, window_params = [{transform_indices = @transform_0, window_bounds = array<i64: 16, 256>}, {transform_indices = @transform_1, window_bounds = array<i64: 256, 256>}, {pipeline_mode = #tpu.pipeline_mode<synchronous>, transform_indices = @transform_2, window_bounds = array<i64: 1, 256>}, {pipeline_mode = #tpu.pipeline_mode<synchronous>, transform_indices = @transform_3, window_bounds = array<i64: 256, 256>}, {pipeline_mode = #tpu.pipeline_mode<synchronous>, transform_indices = @transform_4, window_bounds = array<i64: 1, 256>}, {pipeline_mode = #tpu.pipeline_mode<synchronous>, transform_indices = @transform_5, window_bounds = array<i64: 256, 128>}, {pipeline_mode = #tpu.pipeline_mode<synchronous>, transform_indices = @transform_6, window_bounds = array<i64: 1, 128>}, {transform_indices = @transform_7, window_bounds = array<i64: 16, 128>}]} {
    %c0_i32 = arith.constant 0 : i32
    %0 = arith.cmpi eq, %arg1, %c0_i32 : i32
    %1 = arith.extui %0 : i1 to i32
    %c0_i32_0 = arith.constant 0 : i32
    %2 = arith.cmpi ne, %1, %c0_i32_0 : i32
    scf.if %2 {
      %cst_9 = arith.constant 0.000000e+00 : f32
      %12 = vector.broadcast %cst_9 : f32 to vector<16x256xf32>
      %c0_10 = arith.constant 0 : index
      %c0_11 = arith.constant 0 : index
      %13 = vector.load %arg10[%c0_10, %c0_11] : memref<16x256xf32, #tpu.memory_space<vmem>>, vector<16x256xf32>
      tpu.vector_store %arg10[%c0_10, %c0_11], %12 {strides = array<i32>} : memref<16x256xf32, #tpu.memory_space<vmem>>, vector<16x256xf32>,
    } else {
    }
    %c0 = arith.constant 0 : index
    %c0_1 = arith.constant 0 : index
    %3 = vector.load %arg10[%c0, %c0_1] : memref<16x256xf32, #tpu.memory_space<vmem>>, vector<16x256xf32>
    %c0_2 = arith.constant 0 : index
    %c0_3 = arith.constant 0 : index
    %4 = vector.load %arg2[%c0_2, %c0_3] : memref<16x256xbf16, #tpu.memory_space<vmem>>, vector<16x256xbf16>
    %c0_4 = arith.constant 0 : index
    %c0_5 = arith.constant 0 : index
    %5 = vector.load %arg3[%c0_4, %c0_5] : memref<256x256xbf16, #tpu.memory_space<vmem>>, vector<256x256xbf16>
    %cst = arith.constant dense<0.000000e+00> : vector<16x256xf32>
    %6 = tpu.matmul %4, %5, %cst {dimension_numbers = #tpu.dot_dimension_numbers<[1], [0], [0], [1], [0, 0, 1, 1], [], []>} : vector<16x256xbf16>, vector<256x256xbf16>, vector<16x256xf32> -> vector<16x256xf32>
    %7 = arith.addf %3, %6 : vector<16x256xf32>
    %c0_6 = arith.constant 0 : index
    %c0_7 = arith.constant 0 : index
    %8 = vector.load %arg10[%c0_6, %c0_7] : memref<16x256xf32, #tpu.memory_space<vmem>>, vector<16x256xf32>
    tpu.vector_store %arg10[%c0_6, %c0_7], %7 {strides = array<i32>} : memref<16x256xf32, #tpu.memory_space<vmem>>, vector<16x256xf32>,
    %c1_i32 = arith.constant 1 : i32
    %9 = arith.cmpi eq, %arg1, %c1_i32 : i32
    %10 = arith.extui %9 : i1 to i32
    %c0_i32_8 = arith.constant 0 : i32
    %11 = arith.cmpi ne, %10, %c0_i32_8 : i32
    scf.if %11 {
      %c0_9 = arith.constant 0 : index
      %c0_10 = arith.constant 0 : index
      %12 = vector.load %arg10[%c0_9, %c0_10] : memref<16x256xf32, #tpu.memory_space<vmem>>, vector<16x256xf32>
      %c0_11 = arith.constant 0 : index
      %c0_12 = arith.constant 0 : index
      %13 = vector.load %arg4[%c0_11, %c0_12] : memref<1x256xf32, #tpu.memory_space<vmem>>, vector<1x256xf32>
      %14 = vector.broadcast %13 : vector<1x256xf32> to vector<16x256xf32>
      %15 = arith.addf %12, %14 : vector<16x256xf32>
      %cst_13 = arith.constant 0.000000e+00 : f32
      %16 = vector.broadcast %cst_13 : f32 to vector<16x256xf32>
      %17 = arith.maximumf %15, %16 : vector<16x256xf32>
      %18 = arith.truncf %17 : vector<16x256xf32> to vector<16x256xbf16>
      %c0_14 = arith.constant 0 : index
      %c0_15 = arith.constant 0 : index
      %19 = vector.load %arg5[%c0_14, %c0_15] : memref<256x256xbf16, #tpu.memory_space<vmem>>, vector<256x256xbf16>
      %cst_16 = arith.constant dense<0.000000e+00> : vector<16x256xf32>
      %20 = tpu.matmul %18, %19, %cst_16 {dimension_numbers = #tpu.dot_dimension_numbers<[1], [0], [0], [1], [0, 0, 1, 1], [], []>} : vector<16x256xbf16>, vector<256x256xbf16>, vector<16x256xf32> -> vector<16x256xf32>
      %c0_17 = arith.constant 0 : index
      %c0_18 = arith.constant 0 : index
      %21 = vector.load %arg6[%c0_17, %c0_18] : memref<1x256xf32, #tpu.memory_space<vmem>>, vector<1x256xf32>
      %22 = vector.broadcast %21 : vector<1x256xf32> to vector<16x256xf32>
      %23 = arith.addf %20, %22 : vector<16x256xf32>
      %cst_19 = arith.constant 0.000000e+00 : f32
      %24 = vector.broadcast %cst_19 : f32 to vector<16x256xf32>
      %25 = arith.maximumf %23, %24 : vector<16x256xf32>
      %26 = arith.truncf %25 : vector<16x256xf32> to vector<16x256xbf16>
      %c0_20 = arith.constant 0 : index
      %c0_21 = arith.constant 0 : index
      %27 = vector.load %arg7[%c0_20, %c0_21] : memref<256x128xbf16, #tpu.memory_space<vmem>>, vector<256x128xbf16>
      %cst_22 = arith.constant dense<0.000000e+00> : vector<16x128xf32>
      %28 = tpu.matmul %26, %27, %cst_22 {dimension_numbers = #tpu.dot_dimension_numbers<[1], [0], [0], [1], [0, 0, 1, 1], [], []>} : vector<16x256xbf16>, vector<256x128xbf16>, vector<16x128xf32> -> vector<16x128xf32>
      %c0_23 = arith.constant 0 : index
      %c0_24 = arith.constant 0 : index
      %29 = vector.load %arg8[%c0_23, %c0_24] : memref<1x128xf32, #tpu.memory_space<vmem>>, vector<1x128xf32>
      %30 = vector.broadcast %29 : vector<1x128xf32> to vector<16x128xf32>
      %31 = arith.addf %28, %30 : vector<16x128xf32>
      %c0_25 = arith.constant 0 : index
      %c0_26 = arith.constant 0 : index
      %32 = vector.load %arg9[%c0_25, %c0_26] : memref<16x128xf32, #tpu.memory_space<vmem>>, vector<16x128xf32>
      tpu.vector_store %arg9[%c0_25, %c0_26], %31 {strides = array<i32>} : memref<16x128xf32, #tpu.memory_space<vmem>>, vector<16x128xf32>,
    } else {
    }
    return
  }
  func.func @transform_0(%arg0: i32, %arg1: i32) -> (i32, i32) {
    %c0_i32 = arith.constant 0 : i32
    return %arg0, %arg1 : i32, i32
  }
  func.func @transform_1(%arg0: i32, %arg1: i32) -> (i32, i32) {
    %c0_i32 = arith.constant 0 : i32
    %c0_i32_0 = arith.constant 0 : i32
    return %arg1, %c0_i32 : i32, i32
  }
  func.func @transform_2(%arg0: i32, %arg1: i32) -> (i32, i32) {
    %c0_i32 = arith.constant 0 : i32
    %c0_i32_0 = arith.constant 0 : i32
    %c0_i32_1 = arith.constant 0 : i32
    return %c0_i32, %c0_i32_0 : i32, i32
  }
  func.func @transform_3(%arg0: i32, %arg1: i32) -> (i32, i32) {
    %c0_i32 = arith.constant 0 : i32
    %c0_i32_0 = arith.constant 0 : i32
    %c0_i32_1 = arith.constant 0 : i32
    return %c0_i32, %c0_i32_0 : i32, i32
  }
  func.func @transform_4(%arg0: i32, %arg1: i32) -> (i32, i32) {
    %c0_i32 = arith.constant 0 : i32
    %c0_i32_0 = arith.constant 0 : i32
    %c0_i32_1 = arith.constant 0 : i32
    return %c0_i32, %c0_i32_0 : i32, i32
  }
  func.func @transform_5(%arg0: i32, %arg1: i32) -> (i32, i32) {
    %c0_i32 = arith.constant 0 : i32
    %c0_i32_0 = arith.constant 0 : i32
    %c0_i32_1 = arith.constant 0 : i32
    return %c0_i32, %c0_i32_0 : i32, i32
  }
  func.func @transform_6(%arg0: i32, %arg1: i32) -> (i32, i32) {
    %c0_i32 = arith.constant 0 : i32
    %c0_i32_0 = arith.constant 0 : i32
    %c0_i32_1 = arith.constant 0 : i32
    return %c0_i32, %c0_i32_0 : i32, i32
  }
  func.func @transform_7(%arg0: i32, %arg1: i32) -> (i32, i32) {
    %c0_i32 = arith.constant 0 : i32
    %c0_i32_0 = arith.constant 0 : i32
    return %arg0, %c0_i32 : i32, i32
  }
}

module attributes {stable_mosaic.version = 11 : i64} {
  func.func @alexnet_head_kernel(%arg0: i32, %arg1: i32, %arg2: memref<16x256xbf16, #tpu.memory_space<vmem>>, %arg3: memref<256x256xbf16, #tpu.memory_space<vmem>>, %arg4: memref<1x256xf32, #tpu.memory_space<vmem>>, %arg5: memref<256x256xbf16, #tpu.memory_space<vmem>>, %arg6: memref<1x256xf32, #tpu.memory_space<vmem>>, %arg7: memref<256x128xbf16, #tpu.memory_space<vmem>>, %arg8: memref<1x128xf32, #tpu.memory_space<vmem>>, %arg9: memref<16x128xf32, #tpu.memory_space<vmem>>, %arg10: memref<16x256xf32, #tpu.memory_space<vmem>>) attributes {dimension_semantics = [#tpu.dimension_semantics<parallel>, #tpu.dimension_semantics<arbitrary>], iteration_bounds = array<i64: 2, 2>, scalar_prefetch = 0 : i64, scratch_operands = 1 : i64, tpu.core_type = #tpu.core_type<tc>, window_params = [{transform_indices = @transform_0, window_bounds = array<i64: 16, 256>}, {transform_indices = @transform_1, window_bounds = array<i64: 256, 256>}, {pipeline_mode = #tpu.pipeline_mode<synchronous>, transform_indices = @transform_2, window_bounds = array<i64: 1, 256>}, {pipeline_mode = #tpu.pipeline_mode<synchronous>, transform_indices = @transform_3, window_bounds = array<i64: 256, 256>}, {pipeline_mode = #tpu.pipeline_mode<synchronous>, transform_indices = @transform_4, window_bounds = array<i64: 1, 256>}, {pipeline_mode = #tpu.pipeline_mode<synchronous>, transform_indices = @transform_5, window_bounds = array<i64: 256, 128>}, {pipeline_mode = #tpu.pipeline_mode<synchronous>, transform_indices = @transform_6, window_bounds = array<i64: 1, 128>}, {transform_indices = @transform_7, window_bounds = array<i64: 16, 128>}]} {
    %c0_i32 = arith.constant 0 : i32
    %0 = arith.cmpi eq, %arg1, %c0_i32 : i32
    %1 = arith.extui %0 : i1 to i32
    %c0_i32_0 = arith.constant 0 : i32
    %2 = arith.cmpi ne, %1, %c0_i32_0 : i32
    scf.if %2 {
      %cst_9 = arith.constant 0.000000e+00 : f32
      %12 = vector.broadcast %cst_9 : f32 to vector<16x256xf32>
      %c0_10 = arith.constant 0 : index
      %c0_11 = arith.constant 0 : index
      %13 = vector.load %arg10[%c0_10, %c0_11] : memref<16x256xf32, #tpu.memory_space<vmem>>, vector<16x256xf32>
      tpu.vector_store %arg10[%c0_10, %c0_11], %12 {strides = array<i32>} : memref<16x256xf32, #tpu.memory_space<vmem>>, vector<16x256xf32>,
    } else {
    }
    %c0 = arith.constant 0 : index
    %c0_1 = arith.constant 0 : index
    %3 = vector.load %arg10[%c0, %c0_1] : memref<16x256xf32, #tpu.memory_space<vmem>>, vector<16x256xf32>
    %c0_2 = arith.constant 0 : index
    %c0_3 = arith.constant 0 : index
    %4 = vector.load %arg2[%c0_2, %c0_3] : memref<16x256xbf16, #tpu.memory_space<vmem>>, vector<16x256xbf16>
    %c0_4 = arith.constant 0 : index
    %c0_5 = arith.constant 0 : index
    %5 = vector.load %arg3[%c0_4, %c0_5] : memref<256x256xbf16, #tpu.memory_space<vmem>>, vector<256x256xbf16>
    %cst = arith.constant dense<0.000000e+00> : vector<16x256xf32>
    %6 = tpu.matmul %4, %5, %cst {dimension_numbers = #tpu.dot_dimension_numbers<[1], [0], [0], [1], [0, 0, 1, 1], [], []>} : vector<16x256xbf16>, vector<256x256xbf16>, vector<16x256xf32> -> vector<16x256xf32>
    %7 = arith.addf %3, %6 : vector<16x256xf32>
    %c0_6 = arith.constant 0 : index
    %c0_7 = arith.constant 0 : index
    %8 = vector.load %arg10[%c0_6, %c0_7] : memref<16x256xf32, #tpu.memory_space<vmem>>, vector<16x256xf32>
    tpu.vector_store %arg10[%c0_6, %c0_7], %7 {strides = array<i32>} : memref<16x256xf32, #tpu.memory_space<vmem>>, vector<16x256xf32>,
    %c1_i32 = arith.constant 1 : i32
    %9 = arith.cmpi eq, %arg1, %c1_i32 : i32
    %10 = arith.extui %9 : i1 to i32
    %c0_i32_8 = arith.constant 0 : i32
    %11 = arith.cmpi ne, %10, %c0_i32_8 : i32
    scf.if %11 {
      %c0_9 = arith.constant 0 : index
      %c0_10 = arith.constant 0 : index
      %12 = vector.load %arg10[%c0_9, %c0_10] : memref<16x256xf32, #tpu.memory_space<vmem>>, vector<16x256xf32>
      %c0_11 = arith.constant 0 : index
      %c0_12 = arith.constant 0 : index
      %13 = vector.load %arg4[%c0_11, %c0_12] : memref<1x256xf32, #tpu.memory_space<vmem>>, vector<1x256xf32>
      %14 = vector.broadcast %13 : vector<1x256xf32> to vector<16x256xf32>
      %15 = arith.addf %12, %14 : vector<16x256xf32>
      %cst_13 = arith.constant 0.000000e+00 : f32
      %16 = vector.broadcast %cst_13 : f32 to vector<16x256xf32>
      %17 = arith.maximumf %15, %16 : vector<16x256xf32>
      %18 = arith.truncf %17 : vector<16x256xf32> to vector<16x256xbf16>
      %c0_14 = arith.constant 0 : index
      %c0_15 = arith.constant 0 : index
      %19 = vector.load %arg5[%c0_14, %c0_15] : memref<256x256xbf16, #tpu.memory_space<vmem>>, vector<256x256xbf16>
      %cst_16 = arith.constant dense<0.000000e+00> : vector<16x256xf32>
      %20 = tpu.matmul %18, %19, %cst_16 {dimension_numbers = #tpu.dot_dimension_numbers<[1], [0], [0], [1], [0, 0, 1, 1], [], []>} : vector<16x256xbf16>, vector<256x256xbf16>, vector<16x256xf32> -> vector<16x256xf32>
      %c0_17 = arith.constant 0 : index
      %c0_18 = arith.constant 0 : index
      %21 = vector.load %arg6[%c0_17, %c0_18] : memref<1x256xf32, #tpu.memory_space<vmem>>, vector<1x256xf32>
      %22 = vector.broadcast %21 : vector<1x256xf32> to vector<16x256xf32>
      %23 = arith.addf %20, %22 : vector<16x256xf32>
      %cst_19 = arith.constant 0.000000e+00 : f32
      %24 = vector.broadcast %cst_19 : f32 to vector<16x256xf32>
      %25 = arith.maximumf %23, %24 : vector<16x256xf32>
      %26 = arith.truncf %25 : vector<16x256xf32> to vector<16x256xbf16>
      %c0_20 = arith.constant 0 : index
      %c0_21 = arith.constant 0 : index
      %27 = vector.load %arg7[%c0_20, %c0_21] : memref<256x128xbf16, #tpu.memory_space<vmem>>, vector<256x128xbf16>
      %cst_22 = arith.constant dense<0.000000e+00> : vector<16x128xf32>
      %28 = tpu.matmul %26, %27, %cst_22 {dimension_numbers = #tpu.dot_dimension_numbers<[1], [0], [0], [1], [0, 0, 1, 1], [], []>} : vector<16x256xbf16>, vector<256x128xbf16>, vector<16x128xf32> -> vector<16x128xf32>
      %c0_23 = arith.constant 0 : index
      %c0_24 = arith.constant 0 : index
      %29 = vector.load %arg8[%c0_23, %c0_24] : memref<1x128xf32, #tpu.memory_space<vmem>>, vector<1x128xf32>
      %30 = vector.broadcast %29 : vector<1x128xf32> to vector<16x128xf32>
      %31 = arith.addf %28, %30 : vector<16x128xf32>
      %c0_25 = arith.constant 0 : index
      %c0_26 = arith.constant 0 : index
      %32 = vector.load %arg9[%c0_25, %c0_26] : memref<16x128xf32, #tpu.memory_space<vmem>>, vector<16x128xf32>
      tpu.vector_store %arg9[%c0_25, %c0_26], %31 {strides = array<i32>} : memref<16x128xf32, #tpu.memory_space<vmem>>, vector<16x128xf32>,
    } else {
    }
    return
  }
  func.func @transform_0(%arg0: i32, %arg1: i32) -> (i32, i32) {
    %c0_i32 = arith.constant 0 : i32
    return %arg0, %arg1 : i32, i32
  }
  func.func @transform_1(%arg0: i32, %arg1: i32) -> (i32, i32) {
    %c0_i32 = arith.constant 0 : i32
    %c0_i32_0 = arith.constant 0 : i32
    return %arg1, %c0_i32 : i32, i32
  }
  func.func @transform_2(%arg0: i32, %arg1: i32) -> (i32, i32) {
    %c0_i32 = arith.constant 0 : i32
    %c0_i32_0 = arith.constant 0 : i32
    %c0_i32_1 = arith.constant 0 : i32
    return %c0_i32, %c0_i32_0 : i32, i32
  }
  func.func @transform_3(%arg0: i32, %arg1: i32) -> (i32, i32) {
    %c0_i32 = arith.constant 0 : i32
    %c0_i32_0 = arith.constant 0 : i32
    %c0_i32_1 = arith.constant 0 : i32
    return %c0_i32, %c0_i32_0 : i32, i32
  }
  func.func @transform_4(%arg0: i32, %arg1: i32) -> (i32, i32) {
    %c0_i32 = arith.constant 0 : i32
    %c0_i32_0 = arith.constant 0 : i32
    %c0_i32_1 = arith.constant 0 : i32
    return %c0_i32, %c0_i32_0 : i32, i32
  }
  func.func @transform_5(%arg0: i32, %arg1: i32) -> (i32, i32) {
    %c0_i32 = arith.constant 0 : i32
    %c0_i32_0 = arith.constant 0 : i32
    %c0_i32_1 = arith.constant 0 : i32
    return %c0_i32, %c0_i32_0 : i32, i32
  }
  func.func @transform_6(%arg0: i32, %arg1: i32) -> (i32, i32) {
    %c0_i32 = arith.constant 0 : i32
    %c0_i32_0 = arith.constant 0 : i32
    %c0_i32_1 = arith.constant 0 : i32
    return %c0_i32, %c0_i32_0 : i32, i32
  }
  func.func @transform_7(%arg0: i32, %arg1: i32) -> (i32, i32) {
    %c0_i32 = arith.constant 0 : i32
    %c0_i32_0 = arith.constant 0 : i32
    return %arg0, %c0_i32 : i32, i32
  }
}

</mosaic_0001>

<llo_original>
// kernel: tpu_custom_call.1
$region0: #{tpu_custom_call.1}
  #allocation0 [shape = 'u32[]', space=smem, size = 0x4, offset = 0x4, fixed_abs, tag = 'smem constant byte address 0x4 - core index']
  #allocation1 [shape = 'u32[144,128]{1,0:T(1,128)}', space=vmem, size = 0x12000, scoped, tag = 'internal scratch']
  #allocation2 [shape = 'f32[16,256]{1,0:T(8,128)}', space=vmem, size = 0x4000, scoped, tag = 'scratch operand']
  %s0 = inlined_call_operand.hbm [shape: bf16[32,512], index: 0, kind: input, shape index: {}]
  %s1 = inlined_call_operand.hbm [shape: bf16[512,256], index: 1, kind: input, shape index: {}]
  %s2 = inlined_call_operand.vmem [shape: f32[1,256], index: 2, kind: input, shape index: {}]
  %s3 = inlined_call_operand.hbm [shape: bf16[256,256], index: 3, kind: input, shape index: {}]
  %s4 = inlined_call_operand.vmem [shape: f32[1,256], index: 4, kind: input, shape index: {}]
  %s5 = inlined_call_operand.hbm [shape: bf16[256,128], index: 5, kind: input, shape index: {}]
  %s6 = inlined_call_operand.vmem [shape: f32[1,128], index: 6, kind: input, shape index: {}]
  %s7 = inlined_call_operand.hbm [shape: f32[32,128], index: 7, kind: output, shape index: {}]
  %s8 = sld [smem:[#allocation0]]
  $region85: #{tpu_custom_call.1} parent=0
    _
  %s10 = ssub.s32 1, %s8
  %s11 = scalar_select 0, %s10, %s8
  $region1: #{tpu_custom_call.1} parent=0
    #allocation3 [shape = 'u8[16384]{0}', space=vmem, size = 0x4000, scoped, tag = 'input window, operand 0']
    #allocation4 [shape = 's32[2]{0}', space=sflag, size = 0x8, scoped, tag = 'scoped memory for tpu_custom_call.1']
    #allocation5 [shape = 's32[2]{0}', space=sflag, size = 0x8, scoped, tag = 'scoped memory for tpu_custom_call.1']
    #allocation6 [shape = 'u8[262144]{0}', space=vmem, size = 0x40000, scoped, tag = 'input window, operand 1']
    #allocation7 [shape = 's32[2]{0}', space=sflag, size = 0x8, scoped, tag = 'scoped memory for tpu_custom_call.1']
    #allocation8 [shape = 'u8[131072]{0}', space=vmem, size = 0x20000, scoped, tag = 'input window, operand 3, single buffered']
    #allocation9 [shape = 'u8[65536]{0}', space=vmem, size = 0x10000, scoped, tag = 'input window, operand 5, single buffered']
    #allocation10 [shape = 's32[1]{0}', space=sflag, size = 0x4, scoped, tag = 'scoped memory for tpu_custom_call.1']
    #allocation11 [shape = 'u8[16384]{0}', space=vmem, size = 0x4000, scoped, tag = 'output window, operand 0']
    %12 = vsyncpa [#allocation4], 0
    %s13 = scalar_lea.sflag [#allocation4], 1
    %14 = vsyncpa %s13, 0
    %15 = vsyncpa [#allocation7], 0
    %s16 = scalar_lea.sflag [#allocation7], 1
    %17 = vsyncpa %s16, 0
    %18 = vsyncpa [#allocation10], 0
    %19 = vsyncpa [#allocation5], 0
    %s20 = scalar_lea.sflag [#allocation5], 1
    %21 = vsyncpa %s20, 0
    loop: start=0, step=1, limit=6
    $region2: #{tpu_custom_call.1} parent=1 // loop_pre_header
      _
    $region3: #{tpu_custom_call.1} parent=1 // loop_header
      %s23 = sphi 0, %s27
      %p24 = scmp.ge.s32.totalorder %s23, 6
      %s30 = sphi 0, %s42
      %s31 = sphi 0, %s38
      %s32 = sphi 0, %s30
      %s33 = sphi 0, %s31
      %s34 = sphi 0, %s32
      %s35 = sphi 0, %s33
      %s47 = sphi 0, %s49
      %s50 = sphi 0, %s47
      %s51 = sphi 0, %s50
      %s67 = sphi 0, %s51
      %s73 = sphi 0, %s75
      %s76 = sphi 0, %s73
      %s77 = sphi 0, %s76
      %s93 = sphi 0, %s77
      %s97 = sphi 0, %s97
      %s99 = sphi 0, %s97
      %s100 = sphi 0, %s99
      %s114 = sphi 0, %s100
      %s118 = sphi 0, %s118
      %s120 = sphi 0, %s118
      %s121 = sphi 0, %s120
      %s135 = sphi 0, %s121
      %s139 = sphi 0, %s139
      %s141 = sphi 0, %s139
      %s142 = sphi 0, %s141
      %s156 = sphi 0, %s142
      %s160 = sphi 0, %s160
      %s162 = sphi 0, %s160
      %s163 = sphi 0, %s162
      %s177 = sphi 0, %s163
      %s181 = sphi 0, %s181
      %s183 = sphi 0, %s181
      %s184 = sphi 0, %s183
      %s198 = sphi 0, %s184
      %s204 = sphi 0, %s206
      %s207 = sphi 0, %s204
      %s208 = sphi 0, %s207
      %s224 = sphi 0, %s208
    $region4: #{tpu_custom_call.1} parent=1 // loop_header_branch
      %26 = sbr.rel (%p24) target = $region8
    $region5: #{tpu_custom_call.1} parent=1 // loop_body
      %s28 = ssub.s32 %s23, 1
      %s29 = ssub.s32 %s23, 2
      %s36 = sadd.s32 1, %s31
      %p37 = scmp.ge.s32.totalorder %s36, 2
      %s38 = scalar_select %p37, 0, %s36
      %s39 = sadd.s32 1, %s30
      %s40 = scalar_select %p37, %s39, %s30
      %p41 = scmp.ge.s32.totalorder %s40, 2
      %s42 = scalar_select %p41, 0, %s40
      %s43 = ssub.s32 %s30, %s42
      %s44 = ssub.s32 %s31, %s38
      %s45 = sor.u32 %s43, %s44
      %p46 = scmp.eq.s32.totalorder %s45, 0
      %s48 = sadd.s32 %s47, 1
      %s49 = scalar_select %p46, %s47, %s48
      %p52 = pneg %p46
      %p53 = scmp.eq.s32.totalorder %s23, 3
      %p54 = por %p52, %p53
      %p55 = scmp.ne.s32.totalorder %s47, %s50
      %p56 = scmp.eq.s32.totalorder %s23, 0
      %p57 = por %p55, %p56
      %p58 = scmp.ne.s32.totalorder %s47, %s50
      %p59 = scmp.eq.s32.totalorder %s28, 3
      %p60 = por %p58, %p59
      %p61 = scmp.ne.s32.totalorder %s50, %s51
      %p62 = scmp.eq.s32.totalorder %s28, 0
      %p63 = por %p61, %p62
      %p64 = scmp.ne.s32.totalorder %s50, %s51
      %p65 = scmp.eq.s32.totalorder %s29, 3
      %p66 = por %p64, %p65
      %p68 = scmp.ne.s32.totalorder %s51, %s67
      %p69 = scmp.eq.s32.totalorder %s29, 0
      %p70 = por %p68, %p69
      %s71 = ssub.s32 %s31, %s38
      %p72 = scmp.eq.s32.totalorder %s71, 0
      %s74 = sadd.s32 %s73, 1
      %s75 = scalar_select %p72, %s73, %s74
      %p78 = pneg %p72
      %p79 = scmp.eq.s32.totalorder %s23, 3
      %p80 = por %p78, %p79
      %p81 = scmp.ne.s32.totalorder %s73, %s76
      %p82 = scmp.eq.s32.totalorder %s23, 0
      %p83 = por %p81, %p82
      %p84 = scmp.ne.s32.totalorder %s73, %s76
      %p85 = scmp.eq.s32.totalorder %s28, 3
      %p86 = por %p84, %p85
      %p87 = scmp.ne.s32.totalorder %s76, %s77
      %p88 = scmp.eq.s32.totalorder %s28, 0
      %p89 = por %p87, %p88
      %p90 = scmp.ne.s32.totalorder %s76, %s77
      %p91 = scmp.eq.s32.totalorder %s29, 3
      %p92 = por %p90, %p91
      %p94 = scmp.ne.s32.totalorder %s77, %s93
      %p95 = scmp.eq.s32.totalorder %s29, 0
      %p96 = por %p94, %p95
      %s98 = sadd.s32 %s97, 1
      %p101 = scmp.eq.s32.totalorder %s23, 3
      %p102 = scmp.ne.s32.totalorder %s97, %s99
      %p103 = scmp.eq.s32.totalorder %s23, 0
      %p104 = por %p102, %p103
      %p105 = scmp.ne.s32.totalorder %s97, %s99
      %p106 = scmp.eq.s32.totalorder %s28, 3
      %p107 = por %p105, %p106
      %p108 = scmp.ne.s32.totalorder %s99, %s100
      %p109 = scmp.eq.s32.totalorder %s28, 0
      %p110 = por %p108, %p109
      %p111 = scmp.ne.s32.totalorder %s99, %s100
      %p112 = scmp.eq.s32.totalorder %s29, 3
      %p113 = por %p111, %p112
      %p115 = scmp.ne.s32.totalorder %s100, %s114
      %p116 = scmp.eq.s32.totalorder %s29, 0
      %p117 = por %p115, %p116
      %s119 = sadd.s32 %s118, 1
      %p122 = scmp.eq.s32.totalorder %s23, 3
      %p123 = scmp.ne.s32.totalorder %s118, %s120
      %p124 = scmp.eq.s32.totalorder %s23, 0
      %p125 = por %p123, %p124
      %p126 = scmp.ne.s32.totalorder %s118, %s120
      %p127 = scmp.eq.s32.totalorder %s28, 3
      %p128 = por %p126, %p127
      %p129 = scmp.ne.s32.totalorder %s120, %s121
      %p130 = scmp.eq.s32.totalorder %s28, 0
      %p131 = por %p129, %p130
      %p132 = scmp.ne.s32.totalorder %s120, %s121
      %p133 = scmp.eq.s32.totalorder %s29, 3
      %p134 = por %p132, %p133
      %p136 = scmp.ne.s32.totalorder %s121, %s135
      %p137 = scmp.eq.s32.totalorder %s29, 0
      %p138 = por %p136, %p137
      %s140 = sadd.s32 %s139, 1
      %p143 = scmp.eq.s32.totalorder %s23, 3
      %p144 = scmp.ne.s32.totalorder %s139, %s141
      %p145 = scmp.eq.s32.totalorder %s23, 0
      %p146 = por %p144, %p145
      %p147 = scmp.ne.s32.totalorder %s139, %s141
      %p148 = scmp.eq.s32.totalorder %s28, 3
      %p149 = por %p147, %p148
      %p150 = scmp.ne.s32.totalorder %s141, %s142
      %p151 = scmp.eq.s32.totalorder %s28, 0
      %p152 = por %p150, %p151
      %p153 = scmp.ne.s32.totalorder %s141, %s142
      %p154 = scmp.eq.s32.totalorder %s29, 3
      %p155 = por %p153, %p154
      %p157 = scmp.ne.s32.totalorder %s142, %s156
      %p158 = scmp.eq.s32.totalorder %s29, 0
      %p159 = por %p157, %p158
      %s161 = sadd.s32 %s160, 1
      %p164 = scmp.eq.s32.totalorder %s23, 3
      %p165 = scmp.ne.s32.totalorder %s160, %s162
      %p166 = scmp.eq.s32.totalorder %s23, 0
      %p167 = por %p165, %p166
      %p168 = scmp.ne.s32.totalorder %s160, %s162
      %p169 = scmp.eq.s32.totalorder %s28, 3
      %p170 = por %p168, %p169
      %p171 = scmp.ne.s32.totalorder %s162, %s163
      %p172 = scmp.eq.s32.totalorder %s28, 0
      %p173 = por %p171, %p172
      %p174 = scmp.ne.s32.totalorder %s162, %s163
      %p175 = scmp.eq.s32.totalorder %s29, 3
      %p176 = por %p174, %p175
      %p178 = scmp.ne.s32.totalorder %s163, %s177
      %p179 = scmp.eq.s32.totalorder %s29, 0
      %p180 = por %p178, %p179
      %s182 = sadd.s32 %s181, 1
      %p185 = scmp.eq.s32.totalorder %s23, 3
      %p186 = scmp.ne.s32.totalorder %s181, %s183
      %p187 = scmp.eq.s32.totalorder %s23, 0
      %p188 = por %p186, %p187
      %p189 = scmp.ne.s32.totalorder %s181, %s183
      %p190 = scmp.eq.s32.totalorder %s28, 3
      %p191 = por %p189, %p190
      %p192 = scmp.ne.s32.totalorder %s183, %s184
      %p193 = scmp.eq.s32.totalorder %s28, 0
      %p194 = por %p192, %p193
      %p195 = scmp.ne.s32.totalorder %s183, %s184
      %p196 = scmp.eq.s32.totalorder %s29, 3
      %p197 = por %p195, %p196
      %p199 = scmp.ne.s32.totalorder %s184, %s198
      %p200 = scmp.eq.s32.totalorder %s29, 0
      %p201 = por %p199, %p200
      %s202 = ssub.s32 %s30, %s42
      %p203 = scmp.eq.s32.totalorder %s202, 0
      %s205 = sadd.s32 %s204, 1
      %s206 = scalar_select %p203, %s204, %s205
      %p209 = pneg %p203
      %p210 = scmp.eq.s32.totalorder %s23, 3
      %p211 = por %p209, %p210
      %p212 = scmp.ne.s32.totalorder %s204, %s207
      %p213 = scmp.eq.s32.totalorder %s23, 0
      %p214 = por %p212, %p213
      %p215 = scmp.ne.s32.totalorder %s204, %s207
      %p216 = scmp.eq.s32.totalorder %s28, 3
      %p217 = por %p215, %p216
      %p218 = scmp.ne.s32.totalorder %s207, %s208
      %p219 = scmp.eq.s32.totalorder %s28, 0
      %p220 = por %p218, %p219
      %p221 = scmp.ne.s32.totalorder %s207, %s208
      %p222 = scmp.eq.s32.totalorder %s29, 3
      %p223 = por %p221, %p222
      %p225 = scmp.ne.s32.totalorder %s208, %s224
      %p226 = scmp.eq.s32.totalorder %s29, 0
      %p227 = por %p225, %p226
      %p228 = scmp.le.s32.totalorder 1, %s23
      %p229 = scmp.lt.s32.totalorder %s23, 5
      %p230 = pnand %p228, %p229
      %p231 = pneg %p230
      // Predicated region
      $region9: #{tpu_custom_call.1} parent=5 // pred_check
        _
      $region10: #{tpu_custom_call.1} parent=5 // pred_check_branch
        %233 = sbr.rel (%p230) target = $region12
      $region11: #{tpu_custom_call.1} parent=5 // pred_region
        %s234 = ssub.s32 %s23, 1
        // Predicated region
        $region13: #{tpu_custom_call.1} parent=11 // pred_check
          %p235 = pneg %p110
        $region14: #{tpu_custom_call.1} parent=11 // pred_check_branch
          %237 = sbr.rel (%p235) target = $region16
        $region15: #{tpu_custom_call.1} parent=11 // pred_region
          _
        $region16: #{tpu_custom_call.1} parent=11 // pred_fallthru
          _
        // Predicated region
        $region17: #{tpu_custom_call.1} parent=11 // pred_check
          %p238 = pneg %p131
        $region18: #{tpu_custom_call.1} parent=11 // pred_check_branch
          %240 = sbr.rel (%p238) target = $region20
        $region19: #{tpu_custom_call.1} parent=11 // pred_region
          %s242 = ssub.s32 4096, 4096
          %243 = vsyncadd [#allocation7], %s242
          %s244 = sshll.u32 [#allocation8], 4
          %s245 = int_to_ptr.vmem [resolvable:$true] %s244
          %250 = dma.hbm_to_vmem [thread:$0]  %s3, 4096, %s245, [#allocation7], 128, 128, 8
        $region20: #{tpu_custom_call.1} parent=11 // pred_fallthru
          _
        // Predicated region
        $region21: #{tpu_custom_call.1} parent=11 // pred_check
          %p251 = pneg %p152
        $region22: #{tpu_custom_call.1} parent=11 // pred_check_branch
          %253 = sbr.rel (%p251) target = $region24
        $region23: #{tpu_custom_call.1} parent=11 // pred_region
          _
        $region24: #{tpu_custom_call.1} parent=11 // pred_fallthru
          _
        // Predicated region
        $region25: #{tpu_custom_call.1} parent=11 // pred_check
          %p254 = pneg %p173
        $region26: #{tpu_custom_call.1} parent=11 // pred_check_branch
          %256 = sbr.rel (%p254) target = $region28
        $region27: #{tpu_custom_call.1} parent=11 // pred_region
          %s258 = ssub.s32 2048, 2048
          %259 = vsyncadd [#allocation10], %s258
          %s260 = sshll.u32 [#allocation9], 4
          %s261 = int_to_ptr.vmem [resolvable:$true] %s260
          %266 = dma.hbm_to_vmem [thread:$0]  %s5, 2048, %s261, [#allocation10], 64, 64, 4
        $region28: #{tpu_custom_call.1} parent=11 // pred_fallthru
          _
        // Predicated region
        $region29: #{tpu_custom_call.1} parent=11 // pred_check
          %p267 = pneg %p194
        $region30: #{tpu_custom_call.1} parent=11 // pred_check_branch
          %269 = sbr.rel (%p267) target = $region32
        $region31: #{tpu_custom_call.1} parent=11 // pred_region
          _
        $region32: #{tpu_custom_call.1} parent=11 // pred_fallthru
          _
      $region12: #{tpu_custom_call.1} parent=5 // pred_fallthru
        _
      %p270 = scmp.lt.s32.totalorder %s23, 4
      // Predicated region
      $region33: #{tpu_custom_call.1} parent=5 // pred_check
        %p271 = pneg %p270
      $region34: #{tpu_custom_call.1} parent=5 // pred_check_branch
        %273 = sbr.rel (%p271) target = $region36
      $region35: #{tpu_custom_call.1} parent=5 // pred_region
        // Predicated region
        $region37: #{tpu_custom_call.1} parent=35 // pred_check
          %p274 = pneg %p57
        $region38: #{tpu_custom_call.1} parent=35 // pred_check_branch
          %276 = sbr.rel (%p274) target = $region40
        $region39: #{tpu_custom_call.1} parent=35 // pred_region
          %s277 = sand.u32 %s47, 1
          %s278 = scalar_lea.sflag [#allocation4], %s277
          %s279 = sand.u32 %s47, 1
          %s280 = smul.addr %s279, 16
          %s281 = scalar_lea.vmem [#allocation3], %s280
          %s282 = smul.u32 2, %s30
          %s283 = smul.u32 2, %s31
          %s285 = ssub.s32 256, 256
          %286 = vsyncadd %s278, %s285
          %s287 = smul.addr %s282, 4
          %s288 = sadd.s32 %s283, %s287
          %s289 = smul.addr %s288, 64
          %s290 = scalar_lea.hbm %s0, %s289
          %s291 = sshll.u32 %s281, 4
          %s292 = int_to_ptr.vmem [resolvable:$true] %s291
          %297 = dma.hbm_to_vmem [thread:$0]  %s290, 256, %s292, %s278, 256, 128, 8
        $region40: #{tpu_custom_call.1} parent=35 // pred_fallthru
          _
        // Predicated region
        $region41: #{tpu_custom_call.1} parent=35 // pred_check
          %p298 = pneg %p83
        $region42: #{tpu_custom_call.1} parent=35 // pred_check_branch
          %300 = sbr.rel (%p298) target = $region44
        $region43: #{tpu_custom_call.1} parent=35 // pred_region
          %s301 = sand.u32 %s23, 1
          %s302 = scalar_lea.sflag [#allocation7], %s301
          %s303 = sand.u32 %s73, 1
          %s304 = smul.addr %s303, 256
          %s305 = scalar_lea.vmem [#allocation6], %s304
          %s306 = smul.u32 32, %s31
          %s308 = ssub.s32 4096, 4096
          %309 = vsyncadd %s302, %s308
          %s310 = smul.addr %s306, 2
          %s311 = smul.addr %s310, 64
          %s312 = scalar_lea.hbm %s1, %s311
          %s313 = sshll.u32 %s305, 4
          %s314 = int_to_ptr.vmem [resolvable:$true] %s313
          %319 = dma.hbm_to_vmem [thread:$0]  %s312, 4096, %s314, %s302, 128, 128, 8
        $region44: #{tpu_custom_call.1} parent=35 // pred_fallthru
          _
      $region36: #{tpu_custom_call.1} parent=5 // pred_fallthru
        _
      %p320 = scmp.le.s32.totalorder 1, %s23
      %p321 = scmp.lt.s32.totalorder %s23, 5
      %p322 = pnand %p320, %p321
      %p323 = pneg %p322
      // Predicated region
      $region45: #{tpu_custom_call.1} parent=5 // pred_check
        _
      $region46: #{tpu_custom_call.1} parent=5 // pred_check_branch
        %325 = sbr.rel (%p322) target = $region48
      $region47: #{tpu_custom_call.1} parent=5 // pred_region
        %s326 = ssub.s32 %s23, 1
        %s327 = sand.u32 %s50, 1
        %s328 = scalar_lea.sflag [#allocation4], %s327
        %s329 = sand.u32 %s50, 1
        %s330 = smul.addr %s329, 16
        %s331 = scalar_lea.vmem [#allocation3], %s330
        // Predicated region
        $region49: #{tpu_custom_call.1} parent=47 // pred_check
          %p332 = pneg %p63
        $region50: #{tpu_custom_call.1} parent=47 // pred_check_branch
          %334 = sbr.rel (%p332) target = $region52
        $region51: #{tpu_custom_call.1} parent=47 // pred_region
          %335 = dma.done %s328, 256
        $region52: #{tpu_custom_call.1} parent=47 // pred_fallthru
          _
        %s336 = sand.u32 %s28, 1
        %s337 = scalar_lea.sflag [#allocation7], %s336
        %s338 = sand.u32 %s76, 1
        %s339 = smul.addr %s338, 256
        %s340 = scalar_lea.vmem [#allocation6], %s339
        // Predicated region
        $region53: #{tpu_custom_call.1} parent=47 // pred_check
          %p341 = pneg %p89
        $region54: #{tpu_custom_call.1} parent=47 // pred_check_branch
          %343 = sbr.rel (%p341) target = $region56
        $region55: #{tpu_custom_call.1} parent=47 // pred_region
          %344 = dma.done %s337, 4096
        $region56: #{tpu_custom_call.1} parent=47 // pred_fallthru
          _
        // Predicated region
        $region57: #{tpu_custom_call.1} parent=47 // pred_check
          %p345 = pneg %p131
        $region58: #{tpu_custom_call.1} parent=47 // pred_check_branch
          %347 = sbr.rel (%p345) target = $region60
        $region59: #{tpu_custom_call.1} parent=47 // pred_region
          %348 = dma.done [#allocation7], 4096
        $region60: #{tpu_custom_call.1} parent=47 // pred_fallthru
          _
        // Predicated region
        $region61: #{tpu_custom_call.1} parent=47 // pred_check
          %p349 = pneg %p173
        $region62: #{tpu_custom_call.1} parent=47 // pred_check_branch
          %351 = sbr.rel (%p349) target = $region64
        $region63: #{tpu_custom_call.1} parent=47 // pred_region
          %352 = dma.done [#allocation10], 2048
        $region64: #{tpu_custom_call.1} parent=47 // pred_fallthru
          _
        %s353 = sand.u32 %s50, 1
        %s354 = scalar_lea.sflag [#allocation4], %s353
        %s355 = sand.u32 %s50, 1
        %s356 = smul.addr %s355, 16
        %s357 = scalar_lea.vmem [#allocation3], %s356
        %p358 = pneg %p63
        %p359 = pneg %p60
        %s360 = sand.u32 %s28, 1
        %s361 = scalar_lea.sflag [#allocation7], %s360
        %s362 = sand.u32 %s76, 1
        %s363 = smul.addr %s362, 256
        %s364 = scalar_lea.vmem [#allocation6], %s363
        %p365 = pneg %p89
        %p366 = pneg %p86
        %p367 = pneg %p110
        %p368 = pneg %p107
        %p369 = pneg %p131
        %p370 = pneg %p128
        %p371 = pneg %p152
        %p372 = pneg %p149
        %p373 = pneg %p173
        %p374 = pneg %p170
        %p375 = pneg %p194
        %p376 = pneg %p191
        %p377 = pneg %p220
        %p378 = pneg %p217
        %s379 = sand.u32 %s207, 1
        %s380 = scalar_lea.sflag [#allocation5], %s379
        %s381 = sand.u32 %s207, 1
        %s382 = smul.addr %s381, 16
        %s383 = scalar_lea.vmem [#allocation11], %s382
        %s384 = smul.u32 2, %s32
        %s385 = smul.u32 2, %s33
        %s386 = smul.u32 32, %s33
        %s387 = smul.u32 2, %s32
        %p389 = scmp.eq.s32.totalorder %s33, 0
        // Predicated region
        $region65: #{tpu_custom_call.1} parent=47 // pred_check
          %p390 = pneg %p389
        $region66: #{tpu_custom_call.1} parent=47 // pred_check_branch
          %392 = sbr.rel (%p390) target = $region68
        $region67: #{tpu_custom_call.1} parent=47 // pred_region
          %393 = vst [vmem:[#allocation2] sm:$0xff] 0.0
          %394 = vst [vmem:[#allocation2 + $0x8] sm:$0xff] 0.0
          %395 = vst [vmem:[#allocation2 + $0x10] sm:$0xff] 0.0
          %396 = vst [vmem:[#allocation2 + $0x18] sm:$0xff] 0.0
        $region68: #{tpu_custom_call.1} parent=47 // pred_fallthru
          _
        %v397 = vld [vmem:[#allocation2] sm:$0xff]
        %v398 = vld [vmem:[#allocation2 + $0x8] sm:$0xff]
        %v399 = vld [vmem:[#allocation2 + $0x10] sm:$0xff]
        %v400 = vld [vmem:[#allocation2 + $0x18] sm:$0xff]
        %v401 = vld [vmem:[%s331] sm:$0xff]
        %v402 = vld [vmem:[%s331 + $0x8] sm:$0xff]
        %v403 = vld [vmem:[%s340] sm:$0xff]
        %v404 = vld [vmem:[%s340 + $0x8] sm:$0xff]
        %v405 = vld [vmem:[%s340 + $0x10] sm:$0xff]
        %v406 = vld [vmem:[%s340 + $0x18] sm:$0xff]
        %v407 = vld [vmem:[%s340 + $0x20] sm:$0xff]
        %v408 = vld [vmem:[%s340 + $0x28] sm:$0xff]
        %v409 = vld [vmem:[%s340 + $0x30] sm:$0xff]
        %v410 = vld [vmem:[%s340 + $0x38] sm:$0xff]
        %v411 = vld [vmem:[%s340 + $0x40] sm:$0xff]
        %v412 = vld [vmem:[%s340 + $0x48] sm:$0xff]
        %v413 = vld [vmem:[%s340 + $0x50] sm:$0xff]
        %v414 = vld [vmem:[%s340 + $0x58] sm:$0xff]
        %v415 = vld [vmem:[%s340 + $0x60] sm:$0xff]
        %v416 = vld [vmem:[%s340 + $0x68] sm:$0xff]
        %v417 = vld [vmem:[%s340 + $0x70] sm:$0xff]
        %v418 = vld [vmem:[%s340 + $0x78] sm:$0xff]
        %v419 = vld [vmem:[%s340 + $0x80] sm:$0xff]
        %v420 = vld [vmem:[%s340 + $0x88] sm:$0xff]
        %v421 = vld [vmem:[%s340 + $0x90] sm:$0xff]
        %v422 = vld [vmem:[%s340 + $0x98] sm:$0xff]
        %v423 = vld [vmem:[%s340 + $0xa0] sm:$0xff]
        %v424 = vld [vmem:[%s340 + $0xa8] sm:$0xff]
        %v425 = vld [vmem:[%s340 + $0xb0] sm:$0xff]
        %v426 = vld [vmem:[%s340 + $0xb8] sm:$0xff]
        %v427 = vld [vmem:[%s340 + $0xc0] sm:$0xff]
        %v428 = vld [vmem:[%s340 + $0xc8] sm:$0xff]
        %v429 = vld [vmem:[%s340 + $0xd0] sm:$0xff]
        %v430 = vld [vmem:[%s340 + $0xd8] sm:$0xff]
        %v431 = vld [vmem:[%s340 + $0xe0] sm:$0xff]
        %v432 = vld [vmem:[%s340 + $0xe8] sm:$0xff]
        %v433 = vld [vmem:[%s340 + $0xf0] sm:$0xff]
        %v434 = vld [vmem:[%s340 + $0xf8] sm:$0xff]
        %v437 = vunpack.c.l.b16 %v401
        %v438 = vunpack.c.h.b16 %v401
        %v439 = vunpack.c.l.b16 %v402
        %v440 = vunpack.c.h.b16 %v402
        %v441 = vpack.c.b16 %v439, %v437
        %v442 = vpack.c.b16 %v440, %v438
        %v477 = vunpack.c.l.b16 %v403
        %v478 = vunpack.c.h.b16 %v403
        %v479 = vunpack.c.l.b16 %v404
        %v480 = vunpack.c.h.b16 %v404
        %v481 = vunpack.c.l.b16 %v405
        %v482 = vunpack.c.h.b16 %v405
        %v483 = vunpack.c.l.b16 %v406
        %v484 = vunpack.c.h.b16 %v406
        %v485 = vunpack.c.l.b16 %v407
        %v486 = vunpack.c.h.b16 %v407
        %v487 = vunpack.c.l.b16 %v408
        %v488 = vunpack.c.h.b16 %v408
        %v489 = vunpack.c.l.b16 %v409
        %v490 = vunpack.c.h.b16 %v409
        %v491 = vunpack.c.l.b16 %v410
        %v492 = vunpack.c.h.b16 %v410
        %v493 = vunpack.c.l.b16 %v411
        %v494 = vunpack.c.h.b16 %v411
        %v495 = vunpack.c.l.b16 %v412
        %v496 = vunpack.c.h.b16 %v412
        %v497 = vunpack.c.l.b16 %v413
        %v498 = vunpack.c.h.b16 %v413
        %v499 = vunpack.c.l.b16 %v414
        %v500 = vunpack.c.h.b16 %v414
        %v501 = vunpack.c.l.b16 %v415
        %v502 = vunpack.c.h.b16 %v415
        %v503 = vunpack.c.l.b16 %v416
        %v504 = vunpack.c.h.b16 %v416
        %v505 = vunpack.c.l.b16 %v417
        %v506 = vunpack.c.h.b16 %v417
        %v507 = vunpack.c.l.b16 %v418
        %v508 = vunpack.c.h.b16 %v418
        %v509 = vunpack.c.l.b16 %v419
        %v510 = vunpack.c.h.b16 %v419
        %v511 = vunpack.c.l.b16 %v420
        %v512 = vunpack.c.h.b16 %v420
        %v513 = vunpack.c.l.b16 %v421
        %v514 = vunpack.c.h.b16 %v421
        %v515 = vunpack.c.l.b16 %v422
        %v516 = vunpack.c.h.b16 %v422
        %v517 = vunpack.c.l.b16 %v423
        %v518 = vunpack.c.h.b16 %v423
        %v519 = vunpack.c.l.b16 %v424
        %v520 = vunpack.c.h.b16 %v424
        %v521 = vunpack.c.l.b16 %v425
        %v522 = vunpack.c.h.b16 %v425
        %v523 = vunpack.c.l.b16 %v426
        %v524 = vunpack.c.h.b16 %v426
        %v525 = vunpack.c.l.b16 %v427
        %v526 = vunpack.c.h.b16 %v427
        %v527 = vunpack.c.l.b16 %v428
        %v528 = vunpack.c.h.b16 %v428
        %v529 = vunpack.c.l.b16 %v429
        %v530 = vunpack.c.h.b16 %v429
        %v531 = vunpack.c.l.b16 %v430
        %v532 = vunpack.c.h.b16 %v430
        %v533 = vunpack.c.l.b16 %v431
        %v534 = vunpack.c.h.b16 %v431
        %v535 = vunpack.c.l.b16 %v432
        %v536 = vunpack.c.h.b16 %v432
        %v537 = vunpack.c.l.b16 %v433
        %v538 = vunpack.c.h.b16 %v433
        %v539 = vunpack.c.l.b16 %v434
        %v540 = vunpack.c.h.b16 %v434
        %v541 = vpack.c.b16 %v479, %v477
        %v542 = vpack.c.b16 %v480, %v478
        %v543 = vpack.c.b16 %v483, %v481
        %v544 = vpack.c.b16 %v484, %v482
        %v545 = vpack.c.b16 %v487, %v485
        %v546 = vpack.c.b16 %v488, %v486
        %v547 = vpack.c.b16 %v491, %v489
        %v548 = vpack.c.b16 %v492, %v490
        %v549 = vpack.c.b16 %v495, %v493
        %v550 = vpack.c.b16 %v496, %v494
        %v551 = vpack.c.b16 %v499, %v497
        %v552 = vpack.c.b16 %v500, %v498
        %v553 = vpack.c.b16 %v503, %v501
        %v554 = vpack.c.b16 %v504, %v502
        %v555 = vpack.c.b16 %v507, %v505
        %v556 = vpack.c.b16 %v508, %v506
        %v557 = vpack.c.b16 %v511, %v509
        %v558 = vpack.c.b16 %v512, %v510
        %v559 = vpack.c.b16 %v515, %v513
        %v560 = vpack.c.b16 %v516, %v514
        %v561 = vpack.c.b16 %v519, %v517
        %v562 = vpack.c.b16 %v520, %v518
        %v563 = vpack.c.b16 %v523, %v521
        %v564 = vpack.c.b16 %v524, %v522
        %v565 = vpack.c.b16 %v527, %v525
        %v566 = vpack.c.b16 %v528, %v526
        %v567 = vpack.c.b16 %v531, %v529
        %v568 = vpack.c.b16 %v532, %v530
        %v569 = vpack.c.b16 %v535, %v533
        %v570 = vpack.c.b16 %v536, %v534
        %v571 = vpack.c.b16 %v539, %v537
        %v572 = vpack.c.b16 %v540, %v538
        %605 = vmatprep.subr.bf16.mxu0 %v542
        %606 = vmatpush1.bf16.msra.mxu0 %v541
        %607 = vmatprep.subr.bf16.mxu0 %v544
        %608 = vmatpush1.bf16.msra.mxu0 %v543
        %609 = vmatprep.subr.bf16.mxu0 %v546
        %610 = vmatpush1.bf16.msra.mxu0 %v545
        %611 = vmatprep.subr.bf16.mxu0 %v548
        %612 = vmatpush1.bf16.msra.mxu0 %v547
        %613 = vmatprep.subr.bf16.mxu0 %v550
        %614 = vmatpush1.bf16.msra.mxu0 %v549
        %615 = vmatprep.subr.bf16.mxu0 %v552
        %616 = vmatpush1.bf16.msra.mxu0 %v551
        %617 = vmatprep.subr.bf16.mxu0 %v554
        %618 = vmatpush1.bf16.msra.mxu0 %v553
        %619 = vmatprep.subr.bf16.mxu0 %v556
        %620 = vmatpush1.bf16.msra.mxu0 %v555
        %621 = vmatprep.subr.bf16.mxu0 %v558
        %622 = vmatpush1.bf16.msra.mxu0 %v557
        %623 = vmatprep.subr.bf16.mxu0 %v560
        %624 = vmatpush1.bf16.msra.mxu0 %v559
        %625 = vmatprep.subr.bf16.mxu0 %v562
        %626 = vmatpush1.bf16.msra.mxu0 %v561
        %627 = vmatprep.subr.bf16.mxu0 %v564
        %628 = vmatpush1.bf16.msra.mxu0 %v563
        %629 = vmatprep.subr.bf16.mxu0 %v566
        %630 = vmatpush1.bf16.msra.mxu0 %v565
        %631 = vmatprep.subr.bf16.mxu0 %v568
        %632 = vmatpush1.bf16.msra.mxu0 %v567
        %633 = vmatprep.subr.bf16.mxu0 %v570
        %634 = vmatpush1.bf16.msra.mxu0 %v569
        %635 = vmatprep.subr.bf16.mxu0 %v572
        %636 = vmatpush1.bf16.msra.mxu0 %v571
        %637 = vmatprep.mubr.bf16.mxu0 %v442
        %638 = vmatmul.mubr.bf16.gmra.mrb[0].mxu0 %v441
        %v639 = vpop.f32.mrb[0].mxu0
        %v640 = vadd.f32 0.0, %v639
        %v641 = vpop.f32.mrb[0].mxu0
        %v642 = vadd.f32 0.0, %v641
        %v643 = vpop.f32.mrb[0].mxu0
        %v644 = vadd.f32 0.0, %v643
        %v645 = vpop.f32.mrb[0].mxu0
        %v646 = vadd.f32 0.0, %v645
        %647 = vdwg.mxu0
        %v648 = vadd.f32 %v397, %v640
        %v649 = vadd.f32 %v398, %v642
        %v650 = vadd.f32 %v399, %v644
        %v651 = vadd.f32 %v400, %v646
        %652 = vst [vmem:[#allocation2] sm:$0xff] %v648
        %653 = vst [vmem:[#allocation2 + $0x8] sm:$0xff] %v649
        %654 = vst [vmem:[#allocation2 + $0x10] sm:$0xff] %v650
        %655 = vst [vmem:[#allocation2 + $0x18] sm:$0xff] %v651
        %p656 = scmp.eq.s32.totalorder %s33, 1
        // Predicated region
        $region69: #{tpu_custom_call.1} parent=47 // pred_check
          %p657 = pneg %p656
        $region70: #{tpu_custom_call.1} parent=47 // pred_check_branch
          %659 = sbr.rel (%p657) target = $region72
        $region71: #{tpu_custom_call.1} parent=47 // pred_region
          %v660 = vld [vmem:[#allocation2] sm:$0xff]
          %v661 = vld [vmem:[#allocation2 + $0x8] sm:$0xff]
          %v662 = vld [vmem:[#allocation2 + $0x10] sm:$0xff]
          %v663 = vld [vmem:[#allocation2 + $0x18] sm:$0xff]
          %v664 = vld [vmem:[%s2] sm:$0x3]
          %v666 = vlaneseq
          %v667 = vshrl.u32 %v666, 7
          %v668 = vsub.s32 0, %v667
          %v669 = vrot.slane %v664, %v668
          %v670 = vlaneseq
          %v671 = vshrl.u32 %v670, 7
          %v672 = vsub.s32 1, %v671
          %v673 = vrot.slane %v664, %v672
          %v676 = vadd.f32 %v660, %v669
          %v677 = vadd.f32 %v661, %v673
          %v678 = vadd.f32 %v662, %v669
          %v679 = vadd.f32 %v663, %v673
          %v680 = vmax.f32 %v676, 0.0
          %v681 = vmax.f32 %v677, 0.0
          %v682 = vmax.f32 %v678, 0.0
          %v683 = vmax.f32 %v679, 0.0
          %v684 = vpack.c.bf16 %v682, %v680
          %v685 = vpack.c.bf16 %v683, %v681
          %v686 = vld [vmem:[#allocation8] sm:$0xff]
          %v687 = vld [vmem:[#allocation8 + $0x8] sm:$0xff]
          %v688 = vld [vmem:[#allocation8 + $0x10] sm:$0xff]
          %v689 = vld [vmem:[#allocation8 + $0x18] sm:$0xff]
          %v690 = vld [vmem:[#allocation8 + $0x20] sm:$0xff]
          %v691 = vld [vmem:[#allocation8 + $0x28] sm:$0xff]
          %v692 = vld [vmem:[#allocation8 + $0x30] sm:$0xff]
          %v693 = vld [vmem:[#allocation8 + $0x38] sm:$0xff]
          %v694 = vld [vmem:[#allocation8 + $0x40] sm:$0xff]
          %v695 = vld [vmem:[#allocation8 + $0x48] sm:$0xff]
          %v696 = vld [vmem:[#allocation8 + $0x50] sm:$0xff]
          %v697 = vld [vmem:[#allocation8 + $0x58] sm:$0xff]
          %v698 = vld [vmem:[#allocation8 + $0x60] sm:$0xff]
          %v699 = vld [vmem:[#allocation8 + $0x68] sm:$0xff]
          %v700 = vld [vmem:[#allocation8 + $0x70] sm:$0xff]
          %v701 = vld [vmem:[#allocation8 + $0x78] sm:$0xff]
          %v702 = vld [vmem:[#allocation8 + $0x80] sm:$0xff]
          %v703 = vld [vmem:[#allocation8 + $0x88] sm:$0xff]
          %v704 = vld [vmem:[#allocation8 + $0x90] sm:$0xff]
          %v705 = vld [vmem:[#allocation8 + $0x98] sm:$0xff]
          %v706 = vld [vmem:[#allocation8 + $0xa0] sm:$0xff]
          %v707 = vld [vmem:[#allocation8 + $0xa8] sm:$0xff]
          %v708 = vld [vmem:[#allocation8 + $0xb0] sm:$0xff]
          %v709 = vld [vmem:[#allocation8 + $0xb8] sm:$0xff]
          %v710 = vld [vmem:[#allocation8 + $0xc0] sm:$0xff]
          %v711 = vld [vmem:[#allocation8 + $0xc8] sm:$0xff]
          %v712 = vld [vmem:[#allocation8 + $0xd0] sm:$0xff]
          %v713 = vld [vmem:[#allocation8 + $0xd8] sm:$0xff]
          %v714 = vld [vmem:[#allocation8 + $0xe0] sm:$0xff]
          %v715 = vld [vmem:[#allocation8 + $0xe8] sm:$0xff]
          %v716 = vld [vmem:[#allocation8 + $0xf0] sm:$0xff]
          %v717 = vld [vmem:[#allocation8 + $0xf8] sm:$0xff]
          %v718 = vld [vmem:[%s4] sm:$0x3]
          %v720 = vlaneseq
          %v721 = vshrl.u32 %v720, 7
          %v722 = vsub.s32 0, %v721
          %v723 = vrot.slane %v718, %v722
          %v724 = vlaneseq
          %v725 = vshrl.u32 %v724, 7
          %v726 = vsub.s32 1, %v725
          %v727 = vrot.slane %v718, %v726
          %v762 = vunpack.c.l.b16 %v686
          %v763 = vunpack.c.h.b16 %v686
          %v764 = vunpack.c.l.b16 %v687
          %v765 = vunpack.c.h.b16 %v687
          %v766 = vunpack.c.l.b16 %v688
          %v767 = vunpack.c.h.b16 %v688
          %v768 = vunpack.c.l.b16 %v689
          %v769 = vunpack.c.h.b16 %v689
          %v770 = vunpack.c.l.b16 %v690
          %v771 = vunpack.c.h.b16 %v690
          %v772 = vunpack.c.l.b16 %v691
          %v773 = vunpack.c.h.b16 %v691
          %v774 = vunpack.c.l.b16 %v692
          %v775 = vunpack.c.h.b16 %v692
          %v776 = vunpack.c.l.b16 %v693
          %v777 = vunpack.c.h.b16 %v693
          %v778 = vunpack.c.l.b16 %v694
          %v779 = vunpack.c.h.b16 %v694
          %v780 = vunpack.c.l.b16 %v695
          %v781 = vunpack.c.h.b16 %v695
          %v782 = vunpack.c.l.b16 %v696
          %v783 = vunpack.c.h.b16 %v696
          %v784 = vunpack.c.l.b16 %v697
          %v785 = vunpack.c.h.b16 %v697
          %v786 = vunpack.c.l.b16 %v698
          %v787 = vunpack.c.h.b16 %v698
          %v788 = vunpack.c.l.b16 %v699
          %v789 = vunpack.c.h.b16 %v699
          %v790 = vunpack.c.l.b16 %v700
          %v791 = vunpack.c.h.b16 %v700
          %v792 = vunpack.c.l.b16 %v701
          %v793 = vunpack.c.h.b16 %v701
          %v794 = vunpack.c.l.b16 %v702
          %v795 = vunpack.c.h.b16 %v702
          %v796 = vunpack.c.l.b16 %v703
          %v797 = vunpack.c.h.b16 %v703
          %v798 = vunpack.c.l.b16 %v704
          %v799 = vunpack.c.h.b16 %v704
          %v800 = vunpack.c.l.b16 %v705
          %v801 = vunpack.c.h.b16 %v705
          %v802 = vunpack.c.l.b16 %v706
          %v803 = vunpack.c.h.b16 %v706
          %v804 = vunpack.c.l.b16 %v707
          %v805 = vunpack.c.h.b16 %v707
          %v806 = vunpack.c.l.b16 %v708
          %v807 = vunpack.c.h.b16 %v708
          %v808 = vunpack.c.l.b16 %v709
          %v809 = vunpack.c.h.b16 %v709
          %v810 = vunpack.c.l.b16 %v710
          %v811 = vunpack.c.h.b16 %v710
          %v812 = vunpack.c.l.b16 %v711
          %v813 = vunpack.c.h.b16 %v711
          %v814 = vunpack.c.l.b16 %v712
          %v815 = vunpack.c.h.b16 %v712
          %v816 = vunpack.c.l.b16 %v713
          %v817 = vunpack.c.h.b16 %v713
          %v818 = vunpack.c.l.b16 %v714
          %v819 = vunpack.c.h.b16 %v714
          %v820 = vunpack.c.l.b16 %v715
          %v821 = vunpack.c.h.b16 %v715
          %v822 = vunpack.c.l.b16 %v716
          %v823 = vunpack.c.h.b16 %v716
          %v824 = vunpack.c.l.b16 %v717
          %v825 = vunpack.c.h.b16 %v717
          %v826 = vpack.c.b16 %v764, %v762
          %v827 = vpack.c.b16 %v765, %v763
          %v828 = vpack.c.b16 %v768, %v766
          %v829 = vpack.c.b16 %v769, %v767
          %v830 = vpack.c.b16 %v772, %v770
          %v831 = vpack.c.b16 %v773, %v771
          %v832 = vpack.c.b16 %v776, %v774
          %v833 = vpack.c.b16 %v777, %v775
          %v834 = vpack.c.b16 %v780, %v778
          %v835 = vpack.c.b16 %v781, %v779
          %v836 = vpack.c.b16 %v784, %v782
          %v837 = vpack.c.b16 %v785, %v783
          %v838 = vpack.c.b16 %v788, %v786
          %v839 = vpack.c.b16 %v789, %v787
          %v840 = vpack.c.b16 %v792, %v790
          %v841 = vpack.c.b16 %v793, %v791
          %v842 = vpack.c.b16 %v796, %v794
          %v843 = vpack.c.b16 %v797, %v795
          %v844 = vpack.c.b16 %v800, %v798
          %v845 = vpack.c.b16 %v801, %v799
          %v846 = vpack.c.b16 %v804, %v802
          %v847 = vpack.c.b16 %v805, %v803
          %v848 = vpack.c.b16 %v808, %v806
          %v849 = vpack.c.b16 %v809, %v807
          %v850 = vpack.c.b16 %v812, %v810
          %v851 = vpack.c.b16 %v813, %v811
          %v852 = vpack.c.b16 %v816, %v814
          %v853 = vpack.c.b16 %v817, %v815
          %v854 = vpack.c.b16 %v820, %v818
          %v855 = vpack.c.b16 %v821, %v819
          %v856 = vpack.c.b16 %v824, %v822
          %v857 = vpack.c.b16 %v825, %v823
          %890 = vmatprep.subr.bf16.mxu0 %v827
          %891 = vmatpush1.bf16.msra.mxu0 %v826
          %892 = vmatprep.subr.bf16.mxu0 %v829
          %893 = vmatpush1.bf16.msra.mxu0 %v828
          %894 = vmatprep.subr.bf16.mxu0 %v831
          %895 = vmatpush1.bf16.msra.mxu0 %v830
          %896 = vmatprep.subr.bf16.mxu0 %v833
          %897 = vmatpush1.bf16.msra.mxu0 %v832
          %898 = vmatprep.subr.bf16.mxu0 %v835
          %899 = vmatpush1.bf16.msra.mxu0 %v834
          %900 = vmatprep.subr.bf16.mxu0 %v837
          %901 = vmatpush1.bf16.msra.mxu0 %v836
          %902 = vmatprep.subr.bf16.mxu0 %v839
          %903 = vmatpush1.bf16.msra.mxu0 %v838
          %904 = vmatprep.subr.bf16.mxu0 %v841
          %905 = vmatpush1.bf16.msra.mxu0 %v840
          %906 = vmatprep.subr.bf16.mxu0 %v843
          %907 = vmatpush1.bf16.msra.mxu0 %v842
          %908 = vmatprep.subr.bf16.mxu0 %v845
          %909 = vmatpush1.bf16.msra.mxu0 %v844
          %910 = vmatprep.subr.bf16.mxu0 %v847
          %911 = vmatpush1.bf16.msra.mxu0 %v846
          %912 = vmatprep.subr.bf16.mxu0 %v849
          %913 = vmatpush1.bf16.msra.mxu0 %v848
          %914 = vmatprep.subr.bf16.mxu0 %v851
          %915 = vmatpush1.bf16.msra.mxu0 %v850
          %916 = vmatprep.subr.bf16.mxu0 %v853
          %917 = vmatpush1.bf16.msra.mxu0 %v852
          %918 = vmatprep.subr.bf16.mxu0 %v855
          %919 = vmatpush1.bf16.msra.mxu0 %v854
          %920 = vmatprep.subr.bf16.mxu0 %v857
          %921 = vmatpush1.bf16.msra.mxu0 %v856
          %922 = vmatprep.mubr.bf16.mxu0 %v685
          %923 = vmatmul.mubr.bf16.gmra.mrb[0].mxu0 %v684
          %v924 = vpop.f32.mrb[0].mxu0
          %v925 = vadd.f32 %v723, %v924
          %v926 = vpop.f32.mrb[0].mxu0
          %v927 = vadd.f32 %v727, %v926
          %v928 = vpop.f32.mrb[0].mxu0
          %v929 = vadd.f32 %v723, %v928
          %v930 = vpop.f32.mrb[0].mxu0
          %v931 = vadd.f32 %v727, %v930
          %932 = vdwg.mxu0
          %v933 = vmax.f32 %v925, 0.0
          %v934 = vmax.f32 %v927, 0.0
          %v935 = vmax.f32 %v929, 0.0
          %v936 = vmax.f32 %v931, 0.0
          %v937 = vpack.c.bf16 %v935, %v933
          %v938 = vpack.c.bf16 %v936, %v934
          %v939 = vld [vmem:[#allocation9] sm:$0xf]
          %v940 = vld [vmem:[#allocation9 + $0x4] sm:$0xf]
          %v941 = vld [vmem:[#allocation9 + $0x8] sm:$0xf]
          %v942 = vld [vmem:[#allocation9 + $0xc] sm:$0xf]
          %v943 = vld [vmem:[#allocation9 + $0x10] sm:$0xf]
          %v944 = vld [vmem:[#allocation9 + $0x14] sm:$0xf]
          %v945 = vld [vmem:[#allocation9 + $0x18] sm:$0xf]
          %v946 = vld [vmem:[#allocation9 + $0x1c] sm:$0xf]
          %v947 = vld [vmem:[#allocation9 + $0x20] sm:$0xf]
          %v948 = vld [vmem:[#allocation9 + $0x24] sm:$0xf]
          %v949 = vld [vmem:[#allocation9 + $0x28] sm:$0xf]
          %v950 = vld [vmem:[#allocation9 + $0x2c] sm:$0xf]
          %v951 = vld [vmem:[#allocation9 + $0x30] sm:$0xf]
          %v952 = vld [vmem:[#allocation9 + $0x34] sm:$0xf]
          %v953 = vld [vmem:[#allocation9 + $0x38] sm:$0xf]
          %v954 = vld [vmem:[#allocation9 + $0x3c] sm:$0xf]
          %v955 = vld [vmem:[#allocation9 + $0x40] sm:$0xf]
          %v956 = vld [vmem:[#allocation9 + $0x44] sm:$0xf]
          %v957 = vld [vmem:[#allocation9 + $0x48] sm:$0xf]
          %v958 = vld [vmem:[#allocation9 + $0x4c] sm:$0xf]
          %v959 = vld [vmem:[#allocation9 + $0x50] sm:$0xf]
          %v960 = vld [vmem:[#allocation9 + $0x54] sm:$0xf]
          %v961 = vld [vmem:[#allocation9 + $0x58] sm:$0xf]
          %v962 = vld [vmem:[#allocation9 + $0x5c] sm:$0xf]
          %v963 = vld [vmem:[#allocation9 + $0x60] sm:$0xf]
          %v964 = vld [vmem:[#allocation9 + $0x64] sm:$0xf]
          %v965 = vld [vmem:[#allocation9 + $0x68] sm:$0xf]
          %v966 = vld [vmem:[#allocation9 + $0x6c] sm:$0xf]
          %v967 = vld [vmem:[#allocation9 + $0x70] sm:$0xf]
          %v968 = vld [vmem:[#allocation9 + $0x74] sm:$0xf]
          %v969 = vld [vmem:[#allocation9 + $0x78] sm:$0xf]
          %v970 = vld [vmem:[#allocation9 + $0x7c] sm:$0xf]
          %v971 = vld [vmem:[%s6] sm:$0x1]
          %v973 = vlaneseq
          %v974 = vshrl.u32 %v973, 7
          %v975 = vsub.s32 0, %v974
          %v976 = vrot.slane %v971, %v975
          %v1010 = vunpack.c.l.b16 %v939
          %v1011 = vunpack.c.l.b16 %v940
          %v1012 = vunpack.c.l.b16 %v941
          %v1013 = vunpack.c.l.b16 %v942
          %v1014 = vunpack.c.l.b16 %v943
          %v1015 = vunpack.c.l.b16 %v944
          %v1016 = vunpack.c.l.b16 %v945
          %v1017 = vunpack.c.l.b16 %v946
          %v1018 = vunpack.c.l.b16 %v947
          %v1019 = vunpack.c.l.b16 %v948
          %v1020 = vunpack.c.l.b16 %v949
          %v1021 = vunpack.c.l.b16 %v950
          %v1022 = vunpack.c.l.b16 %v951
          %v1023 = vunpack.c.l.b16 %v952
          %v1024 = vunpack.c.l.b16 %v953
          %v1025 = vunpack.c.l.b16 %v954
          %v1026 = vunpack.c.l.b16 %v955
          %v1027 = vunpack.c.l.b16 %v956
          %v1028 = vunpack.c.l.b16 %v957
          %v1029 = vunpack.c.l.b16 %v958
          %v1030 = vunpack.c.l.b16 %v959
          %v1031 = vunpack.c.l.b16 %v960
          %v1032 = vunpack.c.l.b16 %v961
          %v1033 = vunpack.c.l.b16 %v962
          %v1034 = vunpack.c.l.b16 %v963
          %v1035 = vunpack.c.l.b16 %v964
          %v1036 = vunpack.c.l.b16 %v965
          %v1037 = vunpack.c.l.b16 %v966
          %v1038 = vunpack.c.l.b16 %v967
          %v1039 = vunpack.c.l.b16 %v968
          %v1040 = vunpack.c.l.b16 %v969
          %v1041 = vunpack.c.l.b16 %v970
          %v1042 = vpack.c.b16 %v1011, %v1010
          %v1043 = vpack.c.b16 %v1013, %v1012
          %v1044 = vpack.c.b16 %v1015, %v1014
          %v1045 = vpack.c.b16 %v1017, %v1016
          %v1046 = vpack.c.b16 %v1019, %v1018
          %v1047 = vpack.c.b16 %v1021, %v1020
          %v1048 = vpack.c.b16 %v1023, %v1022
          %v1049 = vpack.c.b16 %v1025, %v1024
          %v1050 = vpack.c.b16 %v1027, %v1026
          %v1051 = vpack.c.b16 %v1029, %v1028
          %v1052 = vpack.c.b16 %v1031, %v1030
          %v1053 = vpack.c.b16 %v1033, %v1032
          %v1054 = vpack.c.b16 %v1035, %v1034
          %v1055 = vpack.c.b16 %v1037, %v1036
          %v1056 = vpack.c.b16 %v1039, %v1038
          %v1057 = vpack.c.b16 %v1041, %v1040
          %1074 = vmatprep.subr.bf16.mxu0 0
          %1075 = vmatpush1.bf16.msra.mxu0 %v1042
          %1076 = vmatprep.subr.bf16.mxu0 0
          %1077 = vmatpush1.bf16.msra.mxu0 %v1043
          %1078 = vmatprep.subr.bf16.mxu0 0
          %1079 = vmatpush1.bf16.msra.mxu0 %v1044
          %1080 = vmatprep.subr.bf16.mxu0 0
          %1081 = vmatpush1.bf16.msra.mxu0 %v1045
          %1082 = vmatprep.subr.bf16.mxu0 0
          %1083 = vmatpush1.bf16.msra.mxu0 %v1046
          %1084 = vmatprep.subr.bf16.mxu0 0
          %1085 = vmatpush1.bf16.msra.mxu0 %v1047
          %1086 = vmatprep.subr.bf16.mxu0 0
          %1087 = vmatpush1.bf16.msra.mxu0 %v1048
          %1088 = vmatprep.subr.bf16.mxu0 0
          %1089 = vmatpush1.bf16.msra.mxu0 %v1049
          %1090 = vmatprep.subr.bf16.mxu0 0
          %1091 = vmatpush1.bf16.msra.mxu0 %v1050
          %1092 = vmatprep.subr.bf16.mxu0 0
          %1093 = vmatpush1.bf16.msra.mxu0 %v1051
          %1094 = vmatprep.subr.bf16.mxu0 0
          %1095 = vmatpush1.bf16.msra.mxu0 %v1052
          %1096 = vmatprep.subr.bf16.mxu0 0
          %1097 = vmatpush1.bf16.msra.mxu0 %v1053
          %1098 = vmatprep.subr.bf16.mxu0 0
          %1099 = vmatpush1.bf16.msra.mxu0 %v1054
          %1100 = vmatprep.subr.bf16.mxu0 0
          %1101 = vmatpush1.bf16.msra.mxu0 %v1055
          %1102 = vmatprep.subr.bf16.mxu0 0
          %1103 = vmatpush1.bf16.msra.mxu0 %v1056
          %1104 = vmatprep.subr.bf16.mxu0 0
          %1105 = vmatpush1.bf16.msra.mxu0 %v1057
          %1106 = vmatprep.mubr.bf16.mxu0 %v938
          %1107 = vmatmul.mubr.bf16.gmra.mrb[0].mxu0 %v937
          %v1108 = vpop.f32.mrb[0].mxu0
          %v1109 = vadd.f32 %v976, %v1108
          %v1110 = vpop.f32.mrb[0].mxu0
          %v1111 = vpop.f32.mrb[0].mxu0
          %v1112 = vadd.f32 %v976, %v1111
          %v1113 = vpop.f32.mrb[0].mxu0
          %1114 = vdwg.mxu0
          %1115 = vst [vmem:[%s383] sm:$0xff] %v1109
          %1116 = vst [vmem:[%s383 + $0x8] sm:$0xff] %v1112
        $region72: #{tpu_custom_call.1} parent=47 // pred_fallthru
          _
        %s1117 = sand.u32 %s207, 1
        %s1118 = scalar_lea.sflag [#allocation5], %s1117
        %s1119 = sand.u32 %s207, 1
        %s1120 = smul.addr %s1119, 16
        %s1121 = scalar_lea.vmem [#allocation11], %s1120
        // Predicated region
        $region73: #{tpu_custom_call.1} parent=47 // pred_check
          %p1122 = pneg %p217
        $region74: #{tpu_custom_call.1} parent=47 // pred_check_branch
          %1124 = sbr.rel (%p1122) target = $region76
        $region75: #{tpu_custom_call.1} parent=47 // pred_region
          %s1125 = smul.u32 2, %s32
          %s1127 = ssub.s32 256, 256
          %1128 = vsyncadd %s1118, %s1127
          %s1129 = smul.addr %s1125, 128
          %s1130 = scalar_lea.hbm %s7, %s1129
          %s1131 = sshll.u32 %s1121, 4
          %s1132 = int_to_ptr.vmem [resolvable:$true] %s1131
          %1137 = dma.vmem_to_hbm [thread:$0]  %s1132, 256, %s1130, %s1118, 128, 128, 8
        $region76: #{tpu_custom_call.1} parent=47 // pred_fallthru
          _
      $region48: #{tpu_custom_call.1} parent=5 // pred_fallthru
        _
      %p1138 = scmp.le.s32.totalorder 2, %s23
      // Predicated region
      $region77: #{tpu_custom_call.1} parent=5 // pred_check
        %p1139 = pneg %p1138
      $region78: #{tpu_custom_call.1} parent=5 // pred_check_branch
        %1141 = sbr.rel (%p1139) target = $region80
      $region79: #{tpu_custom_call.1} parent=5 // pred_region
        %s1142 = ssub.s32 %s23, 2
        // Predicated region
        $region81: #{tpu_custom_call.1} parent=79 // pred_check
          %p1143 = pneg %p223
        $region82: #{tpu_custom_call.1} parent=79 // pred_check_branch
          %1145 = sbr.rel (%p1143) target = $region84
        $region83: #{tpu_custom_call.1} parent=79 // pred_region
          %s1146 = sand.u32 %s208, 1
          %s1147 = scalar_lea.sflag [#allocation5], %s1146
          %s1148 = sand.u32 %s208, 1
          %s1149 = smul.addr %s1148, 16
          %s1150 = scalar_lea.vmem [#allocation11], %s1149
          %1151 = dma.done %s1147, 256
        $region84: #{tpu_custom_call.1} parent=79 // pred_fallthru
          _
      $region80: #{tpu_custom_call.1} parent=5 // pred_fallthru
        _
    $region6: #{tpu_custom_call.1} parent=1 // loop_footer
      %s27 = sadd.s32 1, %s23
    $region7: #{tpu_custom_call.1} parent=1 // loop_footer_branch
      %22 = sbr.rel target = $region3
    $region8: #{tpu_custom_call.1} parent=1 // loop_exit
      _
    %1152 = vsyncpa [#allocation4], 1
    %s1153 = scalar_lea.sflag [#allocation4], 1
    %1154 = vsyncpa %s1153, 1
    %1155 = vsyncpa [#allocation7], 1
    %s1156 = scalar_lea.sflag [#allocation7], 1
    %1157 = vsyncpa %s1156, 1
    %1158 = vsyncpa [#allocation10], 1
    %1159 = vsyncpa [#allocation5], 1
    %s1160 = scalar_lea.sflag [#allocation5], 1
    %1161 = vsyncpa %s1160, 1

// kernel: tpu_custom_call.1
$region0: #{tpu_custom_call.1}
  #allocation0 [shape = 'u32[]', space=smem, size = 0x4, offset = 0x4, fixed_abs, tag = 'smem constant byte address 0x4 - core index']
  #allocation1 [shape = 'u32[144,128]{1,0:T(1,128)}', space=vmem, size = 0x12000, scoped, tag = 'internal scratch']
  #allocation2 [shape = 'f32[16,256]{1,0:T(8,128)}', space=vmem, size = 0x4000, scoped, tag = 'scratch operand']
  %s0 = inlined_call_operand.hbm [shape: bf16[32,512], index: 0, kind: input, shape index: {}]
  %s1 = inlined_call_operand.hbm [shape: bf16[512,256], index: 1, kind: input, shape index: {}]
  %s2 = inlined_call_operand.vmem [shape: f32[1,256], index: 2, kind: input, shape index: {}]
  %s3 = inlined_call_operand.hbm [shape: bf16[256,256], index: 3, kind: input, shape index: {}]
  %s4 = inlined_call_operand.vmem [shape: f32[1,256], index: 4, kind: input, shape index: {}]
  %s5 = inlined_call_operand.hbm [shape: bf16[256,128], index: 5, kind: input, shape index: {}]
  %s6 = inlined_call_operand.vmem [shape: f32[1,128], index: 6, kind: input, shape index: {}]
  %s7 = inlined_call_operand.hbm [shape: f32[32,128], index: 7, kind: output, shape index: {}]
  %s8 = sld [smem:[#allocation0]]
  $region85: #{tpu_custom_call.1} parent=0
    _
  %s10 = ssub.s32 1, %s8
  %s11 = scalar_select 0, %s10, %s8
  $region1: #{tpu_custom_call.1} parent=0
    #allocation3 [shape = 'u8[16384]{0}', space=vmem, size = 0x4000, scoped, tag = 'input window, operand 0']
    #allocation4 [shape = 's32[2]{0}', space=sflag, size = 0x8, scoped, tag = 'scoped memory for tpu_custom_call.1']
    #allocation5 [shape = 's32[2]{0}', space=sflag, size = 0x8, scoped, tag = 'scoped memory for tpu_custom_call.1']
    #allocation6 [shape = 'u8[262144]{0}', space=vmem, size = 0x40000, scoped, tag = 'input window, operand 1']
    #allocation7 [shape = 's32[2]{0}', space=sflag, size = 0x8, scoped, tag = 'scoped memory for tpu_custom_call.1']
    #allocation8 [shape = 'u8[131072]{0}', space=vmem, size = 0x20000, scoped, tag = 'input window, operand 3, single buffered']
    #allocation9 [shape = 'u8[65536]{0}', space=vmem, size = 0x10000, scoped, tag = 'input window, operand 5, single buffered']
    #allocation10 [shape = 's32[1]{0}', space=sflag, size = 0x4, scoped, tag = 'scoped memory for tpu_custom_call.1']
    #allocation11 [shape = 'u8[16384]{0}', space=vmem, size = 0x4000, scoped, tag = 'output window, operand 0']
    %12 = vsyncpa [#allocation4], 0
    %s13 = scalar_lea.sflag [#allocation4], 1
    %14 = vsyncpa %s13, 0
    %15 = vsyncpa [#allocation7], 0
    %s16 = scalar_lea.sflag [#allocation7], 1
    %17 = vsyncpa %s16, 0
    %18 = vsyncpa [#allocation10], 0
    %19 = vsyncpa [#allocation5], 0
    %s20 = scalar_lea.sflag [#allocation5], 1
    %21 = vsyncpa %s20, 0
    loop: start=0, step=1, limit=6
    $region2: #{tpu_custom_call.1} parent=1 // loop_pre_header
      _
    $region3: #{tpu_custom_call.1} parent=1 // loop_header
      %s23 = sphi 0, %s27
      %p24 = scmp.ge.s32.totalorder %s23, 6
      %s30 = sphi 0, %s42
      %s31 = sphi 0, %s38
      %s32 = sphi 0, %s30
      %s33 = sphi 0, %s31
      %s34 = sphi 0, %s32
      %s35 = sphi 0, %s33
      %s47 = sphi 0, %s49
      %s50 = sphi 0, %s47
      %s51 = sphi 0, %s50
      %s67 = sphi 0, %s51
      %s73 = sphi 0, %s75
      %s76 = sphi 0, %s73
      %s77 = sphi 0, %s76
      %s93 = sphi 0, %s77
      %s97 = sphi 0, %s97
      %s99 = sphi 0, %s97
      %s100 = sphi 0, %s99
      %s114 = sphi 0, %s100
      %s118 = sphi 0, %s118
      %s120 = sphi 0, %s118
      %s121 = sphi 0, %s120
      %s135 = sphi 0, %s121
      %s139 = sphi 0, %s139
      %s141 = sphi 0, %s139
      %s142 = sphi 0, %s141
      %s156 = sphi 0, %s142
      %s160 = sphi 0, %s160
      %s162 = sphi 0, %s160
      %s163 = sphi 0, %s162
      %s177 = sphi 0, %s163
      %s181 = sphi 0, %s181
      %s183 = sphi 0, %s181
      %s184 = sphi 0, %s183
      %s198 = sphi 0, %s184
      %s204 = sphi 0, %s206
      %s207 = sphi 0, %s204
      %s208 = sphi 0, %s207
      %s224 = sphi 0, %s208
    $region4: #{tpu_custom_call.1} parent=1 // loop_header_branch
      %26 = sbr.rel (%p24) target = $region8
    $region5: #{tpu_custom_call.1} parent=1 // loop_body
      %s28 = ssub.s32 %s23, 1
      %s29 = ssub.s32 %s23, 2
      %s36 = sadd.s32 1, %s31
      %p37 = scmp.ge.s32.totalorder %s36, 2
      %s38 = scalar_select %p37, 0, %s36
      %s39 = sadd.s32 1, %s30
      %s40 = scalar_select %p37, %s39, %s30
      %p41 = scmp.ge.s32.totalorder %s40, 2
      %s42 = scalar_select %p41, 0, %s40
      %s43 = ssub.s32 %s30, %s42
      %s44 = ssub.s32 %s31, %s38
      %s45 = sor.u32 %s43, %s44
      %p46 = scmp.eq.s32.totalorder %s45, 0
      %s48 = sadd.s32 %s47, 1
      %s49 = scalar_select %p46, %s47, %s48
      %p52 = pneg %p46
      %p53 = scmp.eq.s32.totalorder %s23, 3
      %p54 = por %p52, %p53
      %p55 = scmp.ne.s32.totalorder %s47, %s50
      %p56 = scmp.eq.s32.totalorder %s23, 0
      %p57 = por %p55, %p56
      %p58 = scmp.ne.s32.totalorder %s47, %s50
      %p59 = scmp.eq.s32.totalorder %s28, 3
      %p60 = por %p58, %p59
      %p61 = scmp.ne.s32.totalorder %s50, %s51
      %p62 = scmp.eq.s32.totalorder %s28, 0
      %p63 = por %p61, %p62
      %p64 = scmp.ne.s32.totalorder %s50, %s51
      %p65 = scmp.eq.s32.totalorder %s29, 3
      %p66 = por %p64, %p65
      %p68 = scmp.ne.s32.totalorder %s51, %s67
      %p69 = scmp.eq.s32.totalorder %s29, 0
      %p70 = por %p68, %p69
      %s71 = ssub.s32 %s31, %s38
      %p72 = scmp.eq.s32.totalorder %s71, 0
      %s74 = sadd.s32 %s73, 1
      %s75 = scalar_select %p72, %s73, %s74
      %p78 = pneg %p72
      %p79 = scmp.eq.s32.totalorder %s23, 3
      %p80 = por %p78, %p79
      %p81 = scmp.ne.s32.totalorder %s73, %s76
      %p82 = scmp.eq.s32.totalorder %s23, 0
      %p83 = por %p81, %p82
      %p84 = scmp.ne.s32.totalorder %s73, %s76
      %p85 = scmp.eq.s32.totalorder %s28, 3
      %p86 = por %p84, %p85
      %p87 = scmp.ne.s32.totalorder %s76, %s77
      %p88 = scmp.eq.s32.totalorder %s28, 0
      %p89 = por %p87, %p88
      %p90 = scmp.ne.s32.totalorder %s76, %s77
      %p91 = scmp.eq.s32.totalorder %s29, 3
      %p92 = por %p90, %p91
      %p94 = scmp.ne.s32.totalorder %s77, %s93
      %p95 = scmp.eq.s32.totalorder %s29, 0
      %p96 = por %p94, %p95
      %s98 = sadd.s32 %s97, 1
      %p101 = scmp.eq.s32.totalorder %s23, 3
      %p102 = scmp.ne.s32.totalorder %s97, %s99
      %p103 = scmp.eq.s32.totalorder %s23, 0
      %p104 = por %p102, %p103
      %p105 = scmp.ne.s32.totalorder %s97, %s99
      %p106 = scmp.eq.s32.totalorder %s28, 3
      %p107 = por %p105, %p106
      %p108 = scmp.ne.s32.totalorder %s99, %s100
      %p109 = scmp.eq.s32.totalorder %s28, 0
      %p110 = por %p108, %p109
      %p111 = scmp.ne.s32.totalorder %s99, %s100
      %p112 = scmp.eq.s32.totalorder %s29, 3
      %p113 = por %p111, %p112
      %p115 = scmp.ne.s32.totalorder %s100, %s114
      %p116 = scmp.eq.s32.totalorder %s29, 0
      %p117 = por %p115, %p116
      %s119 = sadd.s32 %s118, 1
      %p122 = scmp.eq.s32.totalorder %s23, 3
      %p123 = scmp.ne.s32.totalorder %s118, %s120
      %p124 = scmp.eq.s32.totalorder %s23, 0
      %p125 = por %p123, %p124
      %p126 = scmp.ne.s32.totalorder %s118, %s120
      %p127 = scmp.eq.s32.totalorder %s28, 3
      %p128 = por %p126, %p127
      %p129 = scmp.ne.s32.totalorder %s120, %s121
      %p130 = scmp.eq.s32.totalorder %s28, 0
      %p131 = por %p129, %p130
      %p132 = scmp.ne.s32.totalorder %s120, %s121
      %p133 = scmp.eq.s32.totalorder %s29, 3
      %p134 = por %p132, %p133
      %p136 = scmp.ne.s32.totalorder %s121, %s135
      %p137 = scmp.eq.s32.totalorder %s29, 0
      %p138 = por %p136, %p137
      %s140 = sadd.s32 %s139, 1
      %p143 = scmp.eq.s32.totalorder %s23, 3
      %p144 = scmp.ne.s32.totalorder %s139, %s141
      %p145 = scmp.eq.s32.totalorder %s23, 0
      %p146 = por %p144, %p145
      %p147 = scmp.ne.s32.totalorder %s139, %s141
      %p148 = scmp.eq.s32.totalorder %s28, 3
      %p149 = por %p147, %p148
      %p150 = scmp.ne.s32.totalorder %s141, %s142
      %p151 = scmp.eq.s32.totalorder %s28, 0
      %p152 = por %p150, %p151
      %p153 = scmp.ne.s32.totalorder %s141, %s142
      %p154 = scmp.eq.s32.totalorder %s29, 3
      %p155 = por %p153, %p154
      %p157 = scmp.ne.s32.totalorder %s142, %s156
      %p158 = scmp.eq.s32.totalorder %s29, 0
      %p159 = por %p157, %p158
      %s161 = sadd.s32 %s160, 1
      %p164 = scmp.eq.s32.totalorder %s23, 3
      %p165 = scmp.ne.s32.totalorder %s160, %s162
      %p166 = scmp.eq.s32.totalorder %s23, 0
      %p167 = por %p165, %p166
      %p168 = scmp.ne.s32.totalorder %s160, %s162
      %p169 = scmp.eq.s32.totalorder %s28, 3
      %p170 = por %p168, %p169
      %p171 = scmp.ne.s32.totalorder %s162, %s163
      %p172 = scmp.eq.s32.totalorder %s28, 0
      %p173 = por %p171, %p172
      %p174 = scmp.ne.s32.totalorder %s162, %s163
      %p175 = scmp.eq.s32.totalorder %s29, 3
      %p176 = por %p174, %p175
      %p178 = scmp.ne.s32.totalorder %s163, %s177
      %p179 = scmp.eq.s32.totalorder %s29, 0
      %p180 = por %p178, %p179
      %s182 = sadd.s32 %s181, 1
      %p185 = scmp.eq.s32.totalorder %s23, 3
      %p186 = scmp.ne.s32.totalorder %s181, %s183
      %p187 = scmp.eq.s32.totalorder %s23, 0
      %p188 = por %p186, %p187
      %p189 = scmp.ne.s32.totalorder %s181, %s183
      %p190 = scmp.eq.s32.totalorder %s28, 3
      %p191 = por %p189, %p190
      %p192 = scmp.ne.s32.totalorder %s183, %s184
      %p193 = scmp.eq.s32.totalorder %s28, 0
      %p194 = por %p192, %p193
      %p195 = scmp.ne.s32.totalorder %s183, %s184
      %p196 = scmp.eq.s32.totalorder %s29, 3
      %p197 = por %p195, %p196
      %p199 = scmp.ne.s32.totalorder %s184, %s198
      %p200 = scmp.eq.s32.totalorder %s29, 0
      %p201 = por %p199, %p200
      %s202 = ssub.s32 %s30, %s42
      %p203 = scmp.eq.s32.totalorder %s202, 0
      %s205 = sadd.s32 %s204, 1
      %s206 = scalar_select %p203, %s204, %s205
      %p209 = pneg %p203
      %p210 = scmp.eq.s32.totalorder %s23, 3
      %p211 = por %p209, %p210
      %p212 = scmp.ne.s32.totalorder %s204, %s207
      %p213 = scmp.eq.s32.totalorder %s23, 0
      %p214 = por %p212, %p213
      %p215 = scmp.ne.s32.totalorder %s204, %s207
      %p216 = scmp.eq.s32.totalorder %s28, 3
      %p217 = por %p215, %p216
      %p218 = scmp.ne.s32.totalorder %s207, %s208
      %p219 = scmp.eq.s32.totalorder %s28, 0
      %p220 = por %p218, %p219
      %p221 = scmp.ne.s32.totalorder %s207, %s208
      %p222 = scmp.eq.s32.totalorder %s29, 3
      %p223 = por %p221, %p222
      %p225 = scmp.ne.s32.totalorder %s208, %s224
      %p226 = scmp.eq.s32.totalorder %s29, 0
      %p227 = por %p225, %p226
      %p228 = scmp.le.s32.totalorder 1, %s23
      %p229 = scmp.lt.s32.totalorder %s23, 5
      %p230 = pnand %p228, %p229
      %p231 = pneg %p230
      // Predicated region
      $region9: #{tpu_custom_call.1} parent=5 // pred_check
        _
      $region10: #{tpu_custom_call.1} parent=5 // pred_check_branch
        %233 = sbr.rel (%p230) target = $region12
      $region11: #{tpu_custom_call.1} parent=5 // pred_region
        %s234 = ssub.s32 %s23, 1
        // Predicated region
        $region13: #{tpu_custom_call.1} parent=11 // pred_check
          %p235 = pneg %p110
        $region14: #{tpu_custom_call.1} parent=11 // pred_check_branch
          %237 = sbr.rel (%p235) target = $region16
        $region15: #{tpu_custom_call.1} parent=11 // pred_region
          _
        $region16: #{tpu_custom_call.1} parent=11 // pred_fallthru
          _
        // Predicated region
        $region17: #{tpu_custom_call.1} parent=11 // pred_check
          %p238 = pneg %p131
        $region18: #{tpu_custom_call.1} parent=11 // pred_check_branch
          %240 = sbr.rel (%p238) target = $region20
        $region19: #{tpu_custom_call.1} parent=11 // pred_region
          %s242 = ssub.s32 4096, 4096
          %243 = vsyncadd [#allocation7], %s242
          %s244 = sshll.u32 [#allocation8], 4
          %s245 = int_to_ptr.vmem [resolvable:$true] %s244
          %250 = dma.hbm_to_vmem [thread:$0]  %s3, 4096, %s245, [#allocation7], 128, 128, 8
        $region20: #{tpu_custom_call.1} parent=11 // pred_fallthru
          _
        // Predicated region
        $region21: #{tpu_custom_call.1} parent=11 // pred_check
          %p251 = pneg %p152
        $region22: #{tpu_custom_call.1} parent=11 // pred_check_branch
          %253 = sbr.rel (%p251) target = $region24
        $region23: #{tpu_custom_call.1} parent=11 // pred_region
          _
        $region24: #{tpu_custom_call.1} parent=11 // pred_fallthru
          _
        // Predicated region
        $region25: #{tpu_custom_call.1} parent=11 // pred_check
          %p254 = pneg %p173
        $region26: #{tpu_custom_call.1} parent=11 // pred_check_branch
          %256 = sbr.rel (%p254) target = $region28
        $region27: #{tpu_custom_call.1} parent=11 // pred_region
          %s258 = ssub.s32 2048, 2048
          %259 = vsyncadd [#allocation10], %s258
          %s260 = sshll.u32 [#allocation9], 4
          %s261 = int_to_ptr.vmem [resolvable:$true] %s260
          %266 = dma.hbm_to_vmem [thread:$0]  %s5, 2048, %s261, [#allocation10], 64, 64, 4
        $region28: #{tpu_custom_call.1} parent=11 // pred_fallthru
          _
        // Predicated region
        $region29: #{tpu_custom_call.1} parent=11 // pred_check
          %p267 = pneg %p194
        $region30: #{tpu_custom_call.1} parent=11 // pred_check_branch
          %269 = sbr.rel (%p267) target = $region32
        $region31: #{tpu_custom_call.1} parent=11 // pred_region
          _
        $region32: #{tpu_custom_call.1} parent=11 // pred_fallthru
          _
      $region12: #{tpu_custom_call.1} parent=5 // pred_fallthru
        _
      %p270 = scmp.lt.s32.totalorder %s23, 4
      // Predicated region
      $region33: #{tpu_custom_call.1} parent=5 // pred_check
        %p271 = pneg %p270
      $region34: #{tpu_custom_call.1} parent=5 // pred_check_branch
        %273 = sbr.rel (%p271) target = $region36
      $region35: #{tpu_custom_call.1} parent=5 // pred_region
        // Predicated region
        $region37: #{tpu_custom_call.1} parent=35 // pred_check
          %p274 = pneg %p57
        $region38: #{tpu_custom_call.1} parent=35 // pred_check_branch
          %276 = sbr.rel (%p274) target = $region40
        $region39: #{tpu_custom_call.1} parent=35 // pred_region
          %s277 = sand.u32 %s47, 1
          %s278 = scalar_lea.sflag [#allocation4], %s277
          %s279 = sand.u32 %s47, 1
          %s280 = smul.addr %s279, 16
          %s281 = scalar_lea.vmem [#allocation3], %s280
          %s282 = smul.u32 2, %s30
          %s283 = smul.u32 2, %s31
          %s285 = ssub.s32 256, 256
          %286 = vsyncadd %s278, %s285
          %s287 = smul.addr %s282, 4
          %s288 = sadd.s32 %s283, %s287
          %s289 = smul.addr %s288, 64
          %s290 = scalar_lea.hbm %s0, %s289
          %s291 = sshll.u32 %s281, 4
          %s292 = int_to_ptr.vmem [resolvable:$true] %s291
          %297 = dma.hbm_to_vmem [thread:$0]  %s290, 256, %s292, %s278, 256, 128, 8
        $region40: #{tpu_custom_call.1} parent=35 // pred_fallthru
          _
        // Predicated region
        $region41: #{tpu_custom_call.1} parent=35 // pred_check
          %p298 = pneg %p83
        $region42: #{tpu_custom_call.1} parent=35 // pred_check_branch
          %300 = sbr.rel (%p298) target = $region44
        $region43: #{tpu_custom_call.1} parent=35 // pred_region
          %s301 = sand.u32 %s23, 1
          %s302 = scalar_lea.sflag [#allocation7], %s301
          %s303 = sand.u32 %s73, 1
          %s304 = smul.addr %s303, 256
          %s305 = scalar_lea.vmem [#allocation6], %s304
          %s306 = smul.u32 32, %s31
          %s308 = ssub.s32 4096, 4096
          %309 = vsyncadd %s302, %s308
          %s310 = smul.addr %s306, 2
          %s311 = smul.addr %s310, 64
          %s312 = scalar_lea.hbm %s1, %s311
          %s313 = sshll.u32 %s305, 4
          %s314 = int_to_ptr.vmem [resolvable:$true] %s313
          %319 = dma.hbm_to_vmem [thread:$0]  %s312, 4096, %s314, %s302, 128, 128, 8
        $region44: #{tpu_custom_call.1} parent=35 // pred_fallthru
          _
      $region36: #{tpu_custom_call.1} parent=5 // pred_fallthru
        _
      %p320 = scmp.le.s32.totalorder 1, %s23
      %p321 = scmp.lt.s32.totalorder %s23, 5
      %p322 = pnand %p320, %p321
      %p323 = pneg %p322
      // Predicated region
      $region45: #{tpu_custom_call.1} parent=5 // pred_check
        _
      $region46: #{tpu_custom_call.1} parent=5 // pred_check_branch
        %325 = sbr.rel (%p322) target = $region48
      $region47: #{tpu_custom_call.1} parent=5 // pred_region
        %s326 = ssub.s32 %s23, 1
        %s327 = sand.u32 %s50, 1
        %s328 = scalar_lea.sflag [#allocation4], %s327
        %s329 = sand.u32 %s50, 1
        %s330 = smul.addr %s329, 16
        %s331 = scalar_lea.vmem [#allocation3], %s330
        // Predicated region
        $region49: #{tpu_custom_call.1} parent=47 // pred_check
          %p332 = pneg %p63
        $region50: #{tpu_custom_call.1} parent=47 // pred_check_branch
          %334 = sbr.rel (%p332) target = $region52
        $region51: #{tpu_custom_call.1} parent=47 // pred_region
          %335 = dma.done %s328, 256
        $region52: #{tpu_custom_call.1} parent=47 // pred_fallthru
          _
        %s336 = sand.u32 %s28, 1
        %s337 = scalar_lea.sflag [#allocation7], %s336
        %s338 = sand.u32 %s76, 1
        %s339 = smul.addr %s338, 256
        %s340 = scalar_lea.vmem [#allocation6], %s339
        // Predicated region
        $region53: #{tpu_custom_call.1} parent=47 // pred_check
          %p341 = pneg %p89
        $region54: #{tpu_custom_call.1} parent=47 // pred_check_branch
          %343 = sbr.rel (%p341) target = $region56
        $region55: #{tpu_custom_call.1} parent=47 // pred_region
          %344 = dma.done %s337, 4096
        $region56: #{tpu_custom_call.1} parent=47 // pred_fallthru
          _
        // Predicated region
        $region57: #{tpu_custom_call.1} parent=47 // pred_check
          %p345 = pneg %p131
        $region58: #{tpu_custom_call.1} parent=47 // pred_check_branch
          %347 = sbr.rel (%p345) target = $region60
        $region59: #{tpu_custom_call.1} parent=47 // pred_region
          %348 = dma.done [#allocation7], 4096
        $region60: #{tpu_custom_call.1} parent=47 // pred_fallthru
          _
        // Predicated region
        $region61: #{tpu_custom_call.1} parent=47 // pred_check
          %p349 = pneg %p173
        $region62: #{tpu_custom_call.1} parent=47 // pred_check_branch
          %351 = sbr.rel (%p349) target = $region64
        $region63: #{tpu_custom_call.1} parent=47 // pred_region
          %352 = dma.done [#allocation10], 2048
        $region64: #{tpu_custom_call.1} parent=47 // pred_fallthru
          _
        %s353 = sand.u32 %s50, 1
        %s354 = scalar_lea.sflag [#allocation4], %s353
        %s355 = sand.u32 %s50, 1
        %s356 = smul.addr %s355, 16
        %s357 = scalar_lea.vmem [#allocation3], %s356
        %p358 = pneg %p63
        %p359 = pneg %p60
        %s360 = sand.u32 %s28, 1
        %s361 = scalar_lea.sflag [#allocation7], %s360
        %s362 = sand.u32 %s76, 1
        %s363 = smul.addr %s362, 256
        %s364 = scalar_lea.vmem [#allocation6], %s363
        %p365 = pneg %p89
        %p366 = pneg %p86
        %p367 = pneg %p110
        %p368 = pneg %p107
        %p369 = pneg %p131
        %p370 = pneg %p128
        %p371 = pneg %p152
        %p372 = pneg %p149
        %p373 = pneg %p173
        %p374 = pneg %p170
        %p375 = pneg %p194
        %p376 = pneg %p191
        %p377 = pneg %p220
        %p378 = pneg %p217
        %s379 = sand.u32 %s207, 1
        %s380 = scalar_lea.sflag [#allocation5], %s379
        %s381 = sand.u32 %s207, 1
        %s382 = smul.addr %s381, 16
        %s383 = scalar_lea.vmem [#allocation11], %s382
        %s384 = smul.u32 2, %s32
        %s385 = smul.u32 2, %s33
        %s386 = smul.u32 32, %s33
        %s387 = smul.u32 2, %s32
        %p389 = scmp.eq.s32.totalorder %s33, 0
        // Predicated region
        $region65: #{tpu_custom_call.1} parent=47 // pred_check
          %p390 = pneg %p389
        $region66: #{tpu_custom_call.1} parent=47 // pred_check_branch
          %392 = sbr.rel (%p390) target = $region68
        $region67: #{tpu_custom_call.1} parent=47 // pred_region
          %393 = vst [vmem:[#allocation2] sm:$0xff] 0.0
          %394 = vst [vmem:[#allocation2 + $0x8] sm:$0xff] 0.0
          %395 = vst [vmem:[#allocation2 + $0x10] sm:$0xff] 0.0
          %396 = vst [vmem:[#allocation2 + $0x18] sm:$0xff] 0.0
        $region68: #{tpu_custom_call.1} parent=47 // pred_fallthru
          _
        %v397 = vld [vmem:[#allocation2] sm:$0xff]
        %v398 = vld [vmem:[#allocation2 + $0x8] sm:$0xff]
        %v399 = vld [vmem:[#allocation2 + $0x10] sm:$0xff]
        %v400 = vld [vmem:[#allocation2 + $0x18] sm:$0xff]
        %v401 = vld [vmem:[%s331] sm:$0xff]
        %v402 = vld [vmem:[%s331 + $0x8] sm:$0xff]
        %v403 = vld [vmem:[%s340] sm:$0xff]
        %v404 = vld [vmem:[%s340 + $0x8] sm:$0xff]
        %v405 = vld [vmem:[%s340 + $0x10] sm:$0xff]
        %v406 = vld [vmem:[%s340 + $0x18] sm:$0xff]
        %v407 = vld [vmem:[%s340 + $0x20] sm:$0xff]
        %v408 = vld [vmem:[%s340 + $0x28] sm:$0xff]
        %v409 = vld [vmem:[%s340 + $0x30] sm:$0xff]
        %v410 = vld [vmem:[%s340 + $0x38] sm:$0xff]
        %v411 = vld [vmem:[%s340 + $0x40] sm:$0xff]
        %v412 = vld [vmem:[%s340 + $0x48] sm:$0xff]
        %v413 = vld [vmem:[%s340 + $0x50] sm:$0xff]
        %v414 = vld [vmem:[%s340 + $0x58] sm:$0xff]
        %v415 = vld [vmem:[%s340 + $0x60] sm:$0xff]
        %v416 = vld [vmem:[%s340 + $0x68] sm:$0xff]
        %v417 = vld [vmem:[%s340 + $0x70] sm:$0xff]
        %v418 = vld [vmem:[%s340 + $0x78] sm:$0xff]
        %v419 = vld [vmem:[%s340 + $0x80] sm:$0xff]
        %v420 = vld [vmem:[%s340 + $0x88] sm:$0xff]
        %v421 = vld [vmem:[%s340 + $0x90] sm:$0xff]
        %v422 = vld [vmem:[%s340 + $0x98] sm:$0xff]
        %v423 = vld [vmem:[%s340 + $0xa0] sm:$0xff]
        %v424 = vld [vmem:[%s340 + $0xa8] sm:$0xff]
        %v425 = vld [vmem:[%s340 + $0xb0] sm:$0xff]
        %v426 = vld [vmem:[%s340 + $0xb8] sm:$0xff]
        %v427 = vld [vmem:[%s340 + $0xc0] sm:$0xff]
        %v428 = vld [vmem:[%s340 + $0xc8] sm:$0xff]
        %v429 = vld [vmem:[%s340 + $0xd0] sm:$0xff]
        %v430 = vld [vmem:[%s340 + $0xd8] sm:$0xff]
        %v431 = vld [vmem:[%s340 + $0xe0] sm:$0xff]
        %v432 = vld [vmem:[%s340 + $0xe8] sm:$0xff]
        %v433 = vld [vmem:[%s340 + $0xf0] sm:$0xff]
        %v434 = vld [vmem:[%s340 + $0xf8] sm:$0xff]
        %v437 = vunpack.c.l.b16 %v401
        %v438 = vunpack.c.h.b16 %v401
        %v439 = vunpack.c.l.b16 %v402
        %v440 = vunpack.c.h.b16 %v402
        %v441 = vpack.c.b16 %v439, %v437
        %v442 = vpack.c.b16 %v440, %v438
        %v477 = vunpack.c.l.b16 %v403
        %v478 = vunpack.c.h.b16 %v403
        %v479 = vunpack.c.l.b16 %v404
        %v480 = vunpack.c.h.b16 %v404
        %v481 = vunpack.c.l.b16 %v405
        %v482 = vunpack.c.h.b16 %v405
        %v483 = vunpack.c.l.b16 %v406
        %v484 = vunpack.c.h.b16 %v406
        %v485 = vunpack.c.l.b16 %v407
        %v486 = vunpack.c.h.b16 %v407
        %v487 = vunpack.c.l.b16 %v408
        %v488 = vunpack.c.h.b16 %v408
        %v489 = vunpack.c.l.b16 %v409
        %v490 = vunpack.c.h.b16 %v409
        %v491 = vunpack.c.l.b16 %v410
        %v492 = vunpack.c.h.b16 %v410
        %v493 = vunpack.c.l.b16 %v411
        %v494 = vunpack.c.h.b16 %v411
        %v495 = vunpack.c.l.b16 %v412
        %v496 = vunpack.c.h.b16 %v412
        %v497 = vunpack.c.l.b16 %v413
        %v498 = vunpack.c.h.b16 %v413
        %v499 = vunpack.c.l.b16 %v414
        %v500 = vunpack.c.h.b16 %v414
        %v501 = vunpack.c.l.b16 %v415
        %v502 = vunpack.c.h.b16 %v415
        %v503 = vunpack.c.l.b16 %v416
        %v504 = vunpack.c.h.b16 %v416
        %v505 = vunpack.c.l.b16 %v417
        %v506 = vunpack.c.h.b16 %v417
        %v507 = vunpack.c.l.b16 %v418
        %v508 = vunpack.c.h.b16 %v418
        %v509 = vunpack.c.l.b16 %v419
        %v510 = vunpack.c.h.b16 %v419
        %v511 = vunpack.c.l.b16 %v420
        %v512 = vunpack.c.h.b16 %v420
        %v513 = vunpack.c.l.b16 %v421
        %v514 = vunpack.c.h.b16 %v421
        %v515 = vunpack.c.l.b16 %v422
        %v516 = vunpack.c.h.b16 %v422
        %v517 = vunpack.c.l.b16 %v423
        %v518 = vunpack.c.h.b16 %v423
        %v519 = vunpack.c.l.b16 %v424
        %v520 = vunpack.c.h.b16 %v424
        %v521 = vunpack.c.l.b16 %v425
        %v522 = vunpack.c.h.b16 %v425
        %v523 = vunpack.c.l.b16 %v426
        %v524 = vunpack.c.h.b16 %v426
        %v525 = vunpack.c.l.b16 %v427
        %v526 = vunpack.c.h.b16 %v427
        %v527 = vunpack.c.l.b16 %v428
        %v528 = vunpack.c.h.b16 %v428
        %v529 = vunpack.c.l.b16 %v429
        %v530 = vunpack.c.h.b16 %v429
        %v531 = vunpack.c.l.b16 %v430
        %v532 = vunpack.c.h.b16 %v430
        %v533 = vunpack.c.l.b16 %v431
        %v534 = vunpack.c.h.b16 %v431
        %v535 = vunpack.c.l.b16 %v432
        %v536 = vunpack.c.h.b16 %v432
        %v537 = vunpack.c.l.b16 %v433
        %v538 = vunpack.c.h.b16 %v433
        %v539 = vunpack.c.l.b16 %v434
        %v540 = vunpack.c.h.b16 %v434
        %v541 = vpack.c.b16 %v479, %v477
        %v542 = vpack.c.b16 %v480, %v478
        %v543 = vpack.c.b16 %v483, %v481
        %v544 = vpack.c.b16 %v484, %v482
        %v545 = vpack.c.b16 %v487, %v485
        %v546 = vpack.c.b16 %v488, %v486
        %v547 = vpack.c.b16 %v491, %v489
        %v548 = vpack.c.b16 %v492, %v490
        %v549 = vpack.c.b16 %v495, %v493
        %v550 = vpack.c.b16 %v496, %v494
        %v551 = vpack.c.b16 %v499, %v497
        %v552 = vpack.c.b16 %v500, %v498
        %v553 = vpack.c.b16 %v503, %v501
        %v554 = vpack.c.b16 %v504, %v502
        %v555 = vpack.c.b16 %v507, %v505
        %v556 = vpack.c.b16 %v508, %v506
        %v557 = vpack.c.b16 %v511, %v509
        %v558 = vpack.c.b16 %v512, %v510
        %v559 = vpack.c.b16 %v515, %v513
        %v560 = vpack.c.b16 %v516, %v514
        %v561 = vpack.c.b16 %v519, %v517
        %v562 = vpack.c.b16 %v520, %v518
        %v563 = vpack.c.b16 %v523, %v521
        %v564 = vpack.c.b16 %v524, %v522
        %v565 = vpack.c.b16 %v527, %v525
        %v566 = vpack.c.b16 %v528, %v526
        %v567 = vpack.c.b16 %v531, %v529
        %v568 = vpack.c.b16 %v532, %v530
        %v569 = vpack.c.b16 %v535, %v533
        %v570 = vpack.c.b16 %v536, %v534
        %v571 = vpack.c.b16 %v539, %v537
        %v572 = vpack.c.b16 %v540, %v538
        %605 = vmatprep.subr.bf16.mxu0 %v542
        %606 = vmatpush1.bf16.msra.mxu0 %v541
        %607 = vmatprep.subr.bf16.mxu0 %v544
        %608 = vmatpush1.bf16.msra.mxu0 %v543
        %609 = vmatprep.subr.bf16.mxu0 %v546
        %610 = vmatpush1.bf16.msra.mxu0 %v545
        %611 = vmatprep.subr.bf16.mxu0 %v548
        %612 = vmatpush1.bf16.msra.mxu0 %v547
        %613 = vmatprep.subr.bf16.mxu0 %v550
        %614 = vmatpush1.bf16.msra.mxu0 %v549
        %615 = vmatprep.subr.bf16.mxu0 %v552
        %616 = vmatpush1.bf16.msra.mxu0 %v551
        %617 = vmatprep.subr.bf16.mxu0 %v554
        %618 = vmatpush1.bf16.msra.mxu0 %v553
        %619 = vmatprep.subr.bf16.mxu0 %v556
        %620 = vmatpush1.bf16.msra.mxu0 %v555
        %621 = vmatprep.subr.bf16.mxu0 %v558
        %622 = vmatpush1.bf16.msra.mxu0 %v557
        %623 = vmatprep.subr.bf16.mxu0 %v560
        %624 = vmatpush1.bf16.msra.mxu0 %v559
        %625 = vmatprep.subr.bf16.mxu0 %v562
        %626 = vmatpush1.bf16.msra.mxu0 %v561
        %627 = vmatprep.subr.bf16.mxu0 %v564
        %628 = vmatpush1.bf16.msra.mxu0 %v563
        %629 = vmatprep.subr.bf16.mxu0 %v566
        %630 = vmatpush1.bf16.msra.mxu0 %v565
        %631 = vmatprep.subr.bf16.mxu0 %v568
        %632 = vmatpush1.bf16.msra.mxu0 %v567
        %633 = vmatprep.subr.bf16.mxu0 %v570
        %634 = vmatpush1.bf16.msra.mxu0 %v569
        %635 = vmatprep.subr.bf16.mxu0 %v572
        %636 = vmatpush1.bf16.msra.mxu0 %v571
        %637 = vmatprep.mubr.bf16.mxu0 %v442
        %638 = vmatmul.mubr.bf16.gmra.mrb[0].mxu0 %v441
        %v639 = vpop.f32.mrb[0].mxu0
        %v640 = vadd.f32 0.0, %v639
        %v641 = vpop.f32.mrb[0].mxu0
        %v642 = vadd.f32 0.0, %v641
        %v643 = vpop.f32.mrb[0].mxu0
        %v644 = vadd.f32 0.0, %v643
        %v645 = vpop.f32.mrb[0].mxu0
        %v646 = vadd.f32 0.0, %v645
        %647 = vdwg.mxu0
        %v648 = vadd.f32 %v397, %v640
        %v649 = vadd.f32 %v398, %v642
        %v650 = vadd.f32 %v399, %v644
        %v651 = vadd.f32 %v400, %v646
        %652 = vst [vmem:[#allocation2] sm:$0xff] %v648
        %653 = vst [vmem:[#allocation2 + $0x8] sm:$0xff] %v649
        %654 = vst [vmem:[#allocation2 + $0x10] sm:$0xff] %v650
        %655 = vst [vmem:[#allocation2 + $0x18] sm:$0xff] %v651
        %p656 = scmp.eq.s32.totalorder %s33, 1
        // Predicated region
        $region69: #{tpu_custom_call.1} parent=47 // pred_check
          %p657 = pneg %p656
        $region70: #{tpu_custom_call.1} parent=47 // pred_check_branch
          %659 = sbr.rel (%p657) target = $region72
        $region71: #{tpu_custom_call.1} parent=47 // pred_region
          %v660 = vld [vmem:[#allocation2] sm:$0xff]
          %v661 = vld [vmem:[#allocation2 + $0x8] sm:$0xff]
          %v662 = vld [vmem:[#allocation2 + $0x10] sm:$0xff]
          %v663 = vld [vmem:[#allocation2 + $0x18] sm:$0xff]
          %v664 = vld [vmem:[%s2] sm:$0x3]
          %v666 = vlaneseq
          %v667 = vshrl.u32 %v666, 7
          %v668 = vsub.s32 0, %v667
          %v669 = vrot.slane %v664, %v668
          %v670 = vlaneseq
          %v671 = vshrl.u32 %v670, 7
          %v672 = vsub.s32 1, %v671
          %v673 = vrot.slane %v664, %v672
          %v676 = vadd.f32 %v660, %v669
          %v677 = vadd.f32 %v661, %v673
          %v678 = vadd.f32 %v662, %v669
          %v679 = vadd.f32 %v663, %v673
          %v680 = vmax.f32 %v676, 0.0
          %v681 = vmax.f32 %v677, 0.0
          %v682 = vmax.f32 %v678, 0.0
          %v683 = vmax.f32 %v679, 0.0
          %v684 = vpack.c.bf16 %v682, %v680
          %v685 = vpack.c.bf16 %v683, %v681
          %v686 = vld [vmem:[#allocation8] sm:$0xff]
          %v687 = vld [vmem:[#allocation8 + $0x8] sm:$0xff]
          %v688 = vld [vmem:[#allocation8 + $0x10] sm:$0xff]
          %v689 = vld [vmem:[#allocation8 + $0x18] sm:$0xff]
          %v690 = vld [vmem:[#allocation8 + $0x20] sm:$0xff]
          %v691 = vld [vmem:[#allocation8 + $0x28] sm:$0xff]
          %v692 = vld [vmem:[#allocation8 + $0x30] sm:$0xff]
          %v693 = vld [vmem:[#allocation8 + $0x38] sm:$0xff]
          %v694 = vld [vmem:[#allocation8 + $0x40] sm:$0xff]
          %v695 = vld [vmem:[#allocation8 + $0x48] sm:$0xff]
          %v696 = vld [vmem:[#allocation8 + $0x50] sm:$0xff]
          %v697 = vld [vmem:[#allocation8 + $0x58] sm:$0xff]
          %v698 = vld [vmem:[#allocation8 + $0x60] sm:$0xff]
          %v699 = vld [vmem:[#allocation8 + $0x68] sm:$0xff]
          %v700 = vld [vmem:[#allocation8 + $0x70] sm:$0xff]
          %v701 = vld [vmem:[#allocation8 + $0x78] sm:$0xff]
          %v702 = vld [vmem:[#allocation8 + $0x80] sm:$0xff]
          %v703 = vld [vmem:[#allocation8 + $0x88] sm:$0xff]
          %v704 = vld [vmem:[#allocation8 + $0x90] sm:$0xff]
          %v705 = vld [vmem:[#allocation8 + $0x98] sm:$0xff]
          %v706 = vld [vmem:[#allocation8 + $0xa0] sm:$0xff]
          %v707 = vld [vmem:[#allocation8 + $0xa8] sm:$0xff]
          %v708 = vld [vmem:[#allocation8 + $0xb0] sm:$0xff]
          %v709 = vld [vmem:[#allocation8 + $0xb8] sm:$0xff]
          %v710 = vld [vmem:[#allocation8 + $0xc0] sm:$0xff]
          %v711 = vld [vmem:[#allocation8 + $0xc8] sm:$0xff]
          %v712 = vld [vmem:[#allocation8 + $0xd0] sm:$0xff]
          %v713 = vld [vmem:[#allocation8 + $0xd8] sm:$0xff]
          %v714 = vld [vmem:[#allocation8 + $0xe0] sm:$0xff]
          %v715 = vld [vmem:[#allocation8 + $0xe8] sm:$0xff]
          %v716 = vld [vmem:[#allocation8 + $0xf0] sm:$0xff]
          %v717 = vld [vmem:[#allocation8 + $0xf8] sm:$0xff]
          %v718 = vld [vmem:[%s4] sm:$0x3]
          %v720 = vlaneseq
          %v721 = vshrl.u32 %v720, 7
          %v722 = vsub.s32 0, %v721
          %v723 = vrot.slane %v718, %v722
          %v724 = vlaneseq
          %v725 = vshrl.u32 %v724, 7
          %v726 = vsub.s32 1, %v725
          %v727 = vrot.slane %v718, %v726
          %v762 = vunpack.c.l.b16 %v686
          %v763 = vunpack.c.h.b16 %v686
          %v764 = vunpack.c.l.b16 %v687
          %v765 = vunpack.c.h.b16 %v687
          %v766 = vunpack.c.l.b16 %v688
          %v767 = vunpack.c.h.b16 %v688
          %v768 = vunpack.c.l.b16 %v689
          %v769 = vunpack.c.h.b16 %v689
          %v770 = vunpack.c.l.b16 %v690
          %v771 = vunpack.c.h.b16 %v690
          %v772 = vunpack.c.l.b16 %v691
          %v773 = vunpack.c.h.b16 %v691
          %v774 = vunpack.c.l.b16 %v692
          %v775 = vunpack.c.h.b16 %v692
          %v776 = vunpack.c.l.b16 %v693
          %v777 = vunpack.c.h.b16 %v693
          %v778 = vunpack.c.l.b16 %v694
          %v779 = vunpack.c.h.b16 %v694
          %v780 = vunpack.c.l.b16 %v695
          %v781 = vunpack.c.h.b16 %v695
          %v782 = vunpack.c.l.b16 %v696
          %v783 = vunpack.c.h.b16 %v696
          %v784 = vunpack.c.l.b16 %v697
          %v785 = vunpack.c.h.b16 %v697
          %v786 = vunpack.c.l.b16 %v698
          %v787 = vunpack.c.h.b16 %v698
          %v788 = vunpack.c.l.b16 %v699
          %v789 = vunpack.c.h.b16 %v699
          %v790 = vunpack.c.l.b16 %v700
          %v791 = vunpack.c.h.b16 %v700
          %v792 = vunpack.c.l.b16 %v701
          %v793 = vunpack.c.h.b16 %v701
          %v794 = vunpack.c.l.b16 %v702
          %v795 = vunpack.c.h.b16 %v702
          %v796 = vunpack.c.l.b16 %v703
          %v797 = vunpack.c.h.b16 %v703
          %v798 = vunpack.c.l.b16 %v704
          %v799 = vunpack.c.h.b16 %v704
          %v800 = vunpack.c.l.b16 %v705
          %v801 = vunpack.c.h.b16 %v705
          %v802 = vunpack.c.l.b16 %v706
          %v803 = vunpack.c.h.b16 %v706
          %v804 = vunpack.c.l.b16 %v707
          %v805 = vunpack.c.h.b16 %v707
          %v806 = vunpack.c.l.b16 %v708
          %v807 = vunpack.c.h.b16 %v708
          %v808 = vunpack.c.l.b16 %v709
          %v809 = vunpack.c.h.b16 %v709
          %v810 = vunpack.c.l.b16 %v710
          %v811 = vunpack.c.h.b16 %v710
          %v812 = vunpack.c.l.b16 %v711
          %v813 = vunpack.c.h.b16 %v711
          %v814 = vunpack.c.l.b16 %v712
          %v815 = vunpack.c.h.b16 %v712
          %v816 = vunpack.c.l.b16 %v713
          %v817 = vunpack.c.h.b16 %v713
          %v818 = vunpack.c.l.b16 %v714
          %v819 = vunpack.c.h.b16 %v714
          %v820 = vunpack.c.l.b16 %v715
          %v821 = vunpack.c.h.b16 %v715
          %v822 = vunpack.c.l.b16 %v716
          %v823 = vunpack.c.h.b16 %v716
          %v824 = vunpack.c.l.b16 %v717
          %v825 = vunpack.c.h.b16 %v717
          %v826 = vpack.c.b16 %v764, %v762
          %v827 = vpack.c.b16 %v765, %v763
          %v828 = vpack.c.b16 %v768, %v766
          %v829 = vpack.c.b16 %v769, %v767
          %v830 = vpack.c.b16 %v772, %v770
          %v831 = vpack.c.b16 %v773, %v771
          %v832 = vpack.c.b16 %v776, %v774
          %v833 = vpack.c.b16 %v777, %v775
          %v834 = vpack.c.b16 %v780, %v778
          %v835 = vpack.c.b16 %v781, %v779
          %v836 = vpack.c.b16 %v784, %v782
          %v837 = vpack.c.b16 %v785, %v783
          %v838 = vpack.c.b16 %v788, %v786
          %v839 = vpack.c.b16 %v789, %v787
          %v840 = vpack.c.b16 %v792, %v790
          %v841 = vpack.c.b16 %v793, %v791
          %v842 = vpack.c.b16 %v796, %v794
          %v843 = vpack.c.b16 %v797, %v795
          %v844 = vpack.c.b16 %v800, %v798
          %v845 = vpack.c.b16 %v801, %v799
          %v846 = vpack.c.b16 %v804, %v802
          %v847 = vpack.c.b16 %v805, %v803
          %v848 = vpack.c.b16 %v808, %v806
          %v849 = vpack.c.b16 %v809, %v807
          %v850 = vpack.c.b16 %v812, %v810
          %v851 = vpack.c.b16 %v813, %v811
          %v852 = vpack.c.b16 %v816, %v814
          %v853 = vpack.c.b16 %v817, %v815
          %v854 = vpack.c.b16 %v820, %v818
          %v855 = vpack.c.b16 %v821, %v819
          %v856 = vpack.c.b16 %v824, %v822
          %v857 = vpack.c.b16 %v825, %v823
          %890 = vmatprep.subr.bf16.mxu0 %v827
          %891 = vmatpush1.bf16.msra.mxu0 %v826
          %892 = vmatprep.subr.bf16.mxu0 %v829
          %893 = vmatpush1.bf16.msra.mxu0 %v828
          %894 = vmatprep.subr.bf16.mxu0 %v831
          %895 = vmatpush1.bf16.msra.mxu0 %v830
          %896 = vmatprep.subr.bf16.mxu0 %v833
          %897 = vmatpush1.bf16.msra.mxu0 %v832
          %898 = vmatprep.subr.bf16.mxu0 %v835
          %899 = vmatpush1.bf16.msra.mxu0 %v834
          %900 = vmatprep.subr.bf16.mxu0 %v837
          %901 = vmatpush1.bf16.msra.mxu0 %v836
          %902 = vmatprep.subr.bf16.mxu0 %v839
          %903 = vmatpush1.bf16.msra.mxu0 %v838
          %904 = vmatprep.subr.bf16.mxu0 %v841
          %905 = vmatpush1.bf16.msra.mxu0 %v840
          %906 = vmatprep.subr.bf16.mxu0 %v843
          %907 = vmatpush1.bf16.msra.mxu0 %v842
          %908 = vmatprep.subr.bf16.mxu0 %v845
          %909 = vmatpush1.bf16.msra.mxu0 %v844
          %910 = vmatprep.subr.bf16.mxu0 %v847
          %911 = vmatpush1.bf16.msra.mxu0 %v846
          %912 = vmatprep.subr.bf16.mxu0 %v849
          %913 = vmatpush1.bf16.msra.mxu0 %v848
          %914 = vmatprep.subr.bf16.mxu0 %v851
          %915 = vmatpush1.bf16.msra.mxu0 %v850
          %916 = vmatprep.subr.bf16.mxu0 %v853
          %917 = vmatpush1.bf16.msra.mxu0 %v852
          %918 = vmatprep.subr.bf16.mxu0 %v855
          %919 = vmatpush1.bf16.msra.mxu0 %v854
          %920 = vmatprep.subr.bf16.mxu0 %v857
          %921 = vmatpush1.bf16.msra.mxu0 %v856
          %922 = vmatprep.mubr.bf16.mxu0 %v685
          %923 = vmatmul.mubr.bf16.gmra.mrb[0].mxu0 %v684
          %v924 = vpop.f32.mrb[0].mxu0
          %v925 = vadd.f32 %v723, %v924
          %v926 = vpop.f32.mrb[0].mxu0
          %v927 = vadd.f32 %v727, %v926
          %v928 = vpop.f32.mrb[0].mxu0
          %v929 = vadd.f32 %v723, %v928
          %v930 = vpop.f32.mrb[0].mxu0
          %v931 = vadd.f32 %v727, %v930
          %932 = vdwg.mxu0
          %v933 = vmax.f32 %v925, 0.0
          %v934 = vmax.f32 %v927, 0.0
          %v935 = vmax.f32 %v929, 0.0
          %v936 = vmax.f32 %v931, 0.0
          %v937 = vpack.c.bf16 %v935, %v933
          %v938 = vpack.c.bf16 %v936, %v934
          %v939 = vld [vmem:[#allocation9] sm:$0xf]
          %v940 = vld [vmem:[#allocation9 + $0x4] sm:$0xf]
          %v941 = vld [vmem:[#allocation9 + $0x8] sm:$0xf]
          %v942 = vld [vmem:[#allocation9 + $0xc] sm:$0xf]
          %v943 = vld [vmem:[#allocation9 + $0x10] sm:$0xf]
          %v944 = vld [vmem:[#allocation9 + $0x14] sm:$0xf]
          %v945 = vld [vmem:[#allocation9 + $0x18] sm:$0xf]
          %v946 = vld [vmem:[#allocation9 + $0x1c] sm:$0xf]
          %v947 = vld [vmem:[#allocation9 + $0x20] sm:$0xf]
          %v948 = vld [vmem:[#allocation9 + $0x24] sm:$0xf]
          %v949 = vld [vmem:[#allocation9 + $0x28] sm:$0xf]
          %v950 = vld [vmem:[#allocation9 + $0x2c] sm:$0xf]
          %v951 = vld [vmem:[#allocation9 + $0x30] sm:$0xf]
          %v952 = vld [vmem:[#allocation9 + $0x34] sm:$0xf]
          %v953 = vld [vmem:[#allocation9 + $0x38] sm:$0xf]
          %v954 = vld [vmem:[#allocation9 + $0x3c] sm:$0xf]
          %v955 = vld [vmem:[#allocation9 + $0x40] sm:$0xf]
          %v956 = vld [vmem:[#allocation9 + $0x44] sm:$0xf]
          %v957 = vld [vmem:[#allocation9 + $0x48] sm:$0xf]
          %v958 = vld [vmem:[#allocation9 + $0x4c] sm:$0xf]
          %v959 = vld [vmem:[#allocation9 + $0x50] sm:$0xf]
          %v960 = vld [vmem:[#allocation9 + $0x54] sm:$0xf]
          %v961 = vld [vmem:[#allocation9 + $0x58] sm:$0xf]
          %v962 = vld [vmem:[#allocation9 + $0x5c] sm:$0xf]
          %v963 = vld [vmem:[#allocation9 + $0x60] sm:$0xf]
          %v964 = vld [vmem:[#allocation9 + $0x64] sm:$0xf]
          %v965 = vld [vmem:[#allocation9 + $0x68] sm:$0xf]
          %v966 = vld [vmem:[#allocation9 + $0x6c] sm:$0xf]
          %v967 = vld [vmem:[#allocation9 + $0x70] sm:$0xf]
          %v968 = vld [vmem:[#allocation9 + $0x74] sm:$0xf]
          %v969 = vld [vmem:[#allocation9 + $0x78] sm:$0xf]
          %v970 = vld [vmem:[#allocation9 + $0x7c] sm:$0xf]
          %v971 = vld [vmem:[%s6] sm:$0x1]
          %v973 = vlaneseq
          %v974 = vshrl.u32 %v973, 7
          %v975 = vsub.s32 0, %v974
          %v976 = vrot.slane %v971, %v975
          %v1010 = vunpack.c.l.b16 %v939
          %v1011 = vunpack.c.l.b16 %v940
          %v1012 = vunpack.c.l.b16 %v941
          %v1013 = vunpack.c.l.b16 %v942
          %v1014 = vunpack.c.l.b16 %v943
          %v1015 = vunpack.c.l.b16 %v944
          %v1016 = vunpack.c.l.b16 %v945
          %v1017 = vunpack.c.l.b16 %v946
          %v1018 = vunpack.c.l.b16 %v947
          %v1019 = vunpack.c.l.b16 %v948
          %v1020 = vunpack.c.l.b16 %v949
          %v1021 = vunpack.c.l.b16 %v950
          %v1022 = vunpack.c.l.b16 %v951
          %v1023 = vunpack.c.l.b16 %v952
          %v1024 = vunpack.c.l.b16 %v953
          %v1025 = vunpack.c.l.b16 %v954
          %v1026 = vunpack.c.l.b16 %v955
          %v1027 = vunpack.c.l.b16 %v956
          %v1028 = vunpack.c.l.b16 %v957
          %v1029 = vunpack.c.l.b16 %v958
          %v1030 = vunpack.c.l.b16 %v959
          %v1031 = vunpack.c.l.b16 %v960
          %v1032 = vunpack.c.l.b16 %v961
          %v1033 = vunpack.c.l.b16 %v962
          %v1034 = vunpack.c.l.b16 %v963
          %v1035 = vunpack.c.l.b16 %v964
          %v1036 = vunpack.c.l.b16 %v965
          %v1037 = vunpack.c.l.b16 %v966
          %v1038 = vunpack.c.l.b16 %v967
          %v1039 = vunpack.c.l.b16 %v968
          %v1040 = vunpack.c.l.b16 %v969
          %v1041 = vunpack.c.l.b16 %v970
          %v1042 = vpack.c.b16 %v1011, %v1010
          %v1043 = vpack.c.b16 %v1013, %v1012
          %v1044 = vpack.c.b16 %v1015, %v1014
          %v1045 = vpack.c.b16 %v1017, %v1016
          %v1046 = vpack.c.b16 %v1019, %v1018
          %v1047 = vpack.c.b16 %v1021, %v1020
          %v1048 = vpack.c.b16 %v1023, %v1022
          %v1049 = vpack.c.b16 %v1025, %v1024
          %v1050 = vpack.c.b16 %v1027, %v1026
          %v1051 = vpack.c.b16 %v1029, %v1028
          %v1052 = vpack.c.b16 %v1031, %v1030
          %v1053 = vpack.c.b16 %v1033, %v1032
          %v1054 = vpack.c.b16 %v1035, %v1034
          %v1055 = vpack.c.b16 %v1037, %v1036
          %v1056 = vpack.c.b16 %v1039, %v1038
          %v1057 = vpack.c.b16 %v1041, %v1040
          %1074 = vmatprep.subr.bf16.mxu0 0
          %1075 = vmatpush1.bf16.msra.mxu0 %v1042
          %1076 = vmatprep.subr.bf16.mxu0 0
          %1077 = vmatpush1.bf16.msra.mxu0 %v1043
          %1078 = vmatprep.subr.bf16.mxu0 0
          %1079 = vmatpush1.bf16.msra.mxu0 %v1044
          %1080 = vmatprep.subr.bf16.mxu0 0
          %1081 = vmatpush1.bf16.msra.mxu0 %v1045
          %1082 = vmatprep.subr.bf16.mxu0 0
          %1083 = vmatpush1.bf16.msra.mxu0 %v1046
          %1084 = vmatprep.subr.bf16.mxu0 0
          %1085 = vmatpush1.bf16.msra.mxu0 %v1047
          %1086 = vmatprep.subr.bf16.mxu0 0
          %1087 = vmatpush1.bf16.msra.mxu0 %v1048
          %1088 = vmatprep.subr.bf16.mxu0 0
          %1089 = vmatpush1.bf16.msra.mxu0 %v1049
          %1090 = vmatprep.subr.bf16.mxu0 0
          %1091 = vmatpush1.bf16.msra.mxu0 %v1050
          %1092 = vmatprep.subr.bf16.mxu0 0
          %1093 = vmatpush1.bf16.msra.mxu0 %v1051
          %1094 = vmatprep.subr.bf16.mxu0 0
          %1095 = vmatpush1.bf16.msra.mxu0 %v1052
          %1096 = vmatprep.subr.bf16.mxu0 0
          %1097 = vmatpush1.bf16.msra.mxu0 %v1053
          %1098 = vmatprep.subr.bf16.mxu0 0
          %1099 = vmatpush1.bf16.msra.mxu0 %v1054
          %1100 = vmatprep.subr.bf16.mxu0 0
          %1101 = vmatpush1.bf16.msra.mxu0 %v1055
          %1102 = vmatprep.subr.bf16.mxu0 0
          %1103 = vmatpush1.bf16.msra.mxu0 %v1056
          %1104 = vmatprep.subr.bf16.mxu0 0
          %1105 = vmatpush1.bf16.msra.mxu0 %v1057
          %1106 = vmatprep.mubr.bf16.mxu0 %v938
          %1107 = vmatmul.mubr.bf16.gmra.mrb[0].mxu0 %v937
          %v1108 = vpop.f32.mrb[0].mxu0
          %v1109 = vadd.f32 %v976, %v1108
          %v1110 = vpop.f32.mrb[0].mxu0
          %v1111 = vpop.f32.mrb[0].mxu0
          %v1112 = vadd.f32 %v976, %v1111
          %v1113 = vpop.f32.mrb[0].mxu0
          %1114 = vdwg.mxu0
          %1115 = vst [vmem:[%s383] sm:$0xff] %v1109
          %1116 = vst [vmem:[%s383 + $0x8] sm:$0xff] %v1112
        $region72: #{tpu_custom_call.1} parent=47 // pred_fallthru
          _
        %s1117 = sand.u32 %s207, 1
        %s1118 = scalar_lea.sflag [#allocation5], %s1117
        %s1119 = sand.u32 %s207, 1
        %s1120 = smul.addr %s1119, 16
        %s1121 = scalar_lea.vmem [#allocation11], %s1120
        // Predicated region
        $region73: #{tpu_custom_call.1} parent=47 // pred_check
          %p1122 = pneg %p217
        $region74: #{tpu_custom_call.1} parent=47 // pred_check_branch
          %1124 = sbr.rel (%p1122) target = $region76
        $region75: #{tpu_custom_call.1} parent=47 // pred_region
          %s1125 = smul.u32 2, %s32
          %s1127 = ssub.s32 256, 256
          %1128 = vsyncadd %s1118, %s1127
          %s1129 = smul.addr %s1125, 128
          %s1130 = scalar_lea.hbm %s7, %s1129
          %s1131 = sshll.u32 %s1121, 4
          %s1132 = int_to_ptr.vmem [resolvable:$true] %s1131
          %1137 = dma.vmem_to_hbm [thread:$0]  %s1132, 256, %s1130, %s1118, 128, 128, 8
        $region76: #{tpu_custom_call.1} parent=47 // pred_fallthru
          _
      $region48: #{tpu_custom_call.1} parent=5 // pred_fallthru
        _
      %p1138 = scmp.le.s32.totalorder 2, %s23
      // Predicated region
      $region77: #{tpu_custom_call.1} parent=5 // pred_check
        %p1139 = pneg %p1138
      $region78: #{tpu_custom_call.1} parent=5 // pred_check_branch
        %1141 = sbr.rel (%p1139) target = $region80
      $region79: #{tpu_custom_call.1} parent=5 // pred_region
        %s1142 = ssub.s32 %s23, 2
        // Predicated region
        $region81: #{tpu_custom_call.1} parent=79 // pred_check
          %p1143 = pneg %p223
        $region82: #{tpu_custom_call.1} parent=79 // pred_check_branch
          %1145 = sbr.rel (%p1143) target = $region84
        $region83: #{tpu_custom_call.1} parent=79 // pred_region
          %s1146 = sand.u32 %s208, 1
          %s1147 = scalar_lea.sflag [#allocation5], %s1146
          %s1148 = sand.u32 %s208, 1
          %s1149 = smul.addr %s1148, 16
          %s1150 = scalar_lea.vmem [#allocation11], %s1149
          %1151 = dma.done %s1147, 256
        $region84: #{tpu_custom_call.1} parent=79 // pred_fallthru
          _
      $region80: #{tpu_custom_call.1} parent=5 // pred_fallthru
        _
    $region6: #{tpu_custom_call.1} parent=1 // loop_footer
      %s27 = sadd.s32 1, %s23
    $region7: #{tpu_custom_call.1} parent=1 // loop_footer_branch
      %22 = sbr.rel target = $region3
    $region8: #{tpu_custom_call.1} parent=1 // loop_exit
      _
    %1152 = vsyncpa [#allocation4], 1
    %s1153 = scalar_lea.sflag [#allocation4], 1
    %1154 = vsyncpa %s1153, 1
    %1155 = vsyncpa [#allocation7], 1
    %s1156 = scalar_lea.sflag [#allocation7], 1
    %1157 = vsyncpa %s1156, 1
    %1158 = vsyncpa [#allocation10], 1
    %1159 = vsyncpa [#allocation5], 1
    %s1160 = scalar_lea.sflag [#allocation5], 1
    %1161 = vsyncpa %s1160, 1

</llo_original>
